<compile_context>
chip_gen: v5e
topology: v5e:2x2
jax: 0.10.0
libtpu: 0.0.40
codegen_flags: <defaults>
</compile_context>

<pallas_src>
import functools

import jax
import jax.numpy as jnp
import numpy as np
from jax.experimental import pallas as pl
from jax.experimental.pallas import tpu as pltpu

_LANE = 128
_NEG = -1e30  # finite "-inf" for padded logit lanes (keeps 0 * logp finite)


# ---------------------------------------------------------------------------
# Pallas kernel
# ---------------------------------------------------------------------------
def _recon_loss_kernel(a_ref, b_ref, aux_ref, logits_ref, tgt_ref, w_ref,
                       scal_ref, act_ref, *, n_classes, label_smoothing,
                       lambda_val, lambda_type):
    f32 = jnp.float32

    # ---- fused pass over both slabs: MSE sums + cosine dot products -------
    a = a_ref[...]                       # [B, 2S, Dp]  inputs (num|img|txt|spec)
    b = b_ref[...]                       # [B, 2S, Dp]  reconstructions
    diff = a - b
    sq = jnp.sum(diff * diff, axis=-1)   # [B, 2S]  sum of squared error
    w12 = jnp.sum(a * b, axis=-1)        # [B, 2S]
    w11 = jnp.sum(a * a, axis=-1)
    w22 = jnp.sum(b * b, axis=-1)

    wv = aux_ref[0]      # (1/D) * value-mask (torch's permuted layout), 0 on spec rows
    wt = aux_ref[1]      # (1/D_spec) * mask on spec rows, 0 elsewhere
    m_num = aux_ref[2]   # mask on numerics rows only
    m_img = aux_ref[3]   # mask on images rows only
    m_txt = aux_ref[4]   # mask on texts rows only
    m_spec = aux_ref[5]  # mask on types_spec rows only

    # cosine similarity (torch eps = 1e-8 on the product of norms)
    sim = w12 * jax.lax.rsqrt(jnp.maximum(w11 * w22, f32(1e-16)))   # [B, 2S]

    n_masked = jnp.sum(m_spec, keepdims=True)        # (1, 1)
    inv_n = 1.0 / n_masked                           # exact reciprocal, reused 4x

    value_loss = jnp.sum(sq * wv, keepdims=True) * inv_n
    spec_sum = jnp.sum(sq * wt, keepdims=True)

    # ---- weighted, label-smoothed cross entropy (ignore_index = -1) -------
    z = logits_ref[...]                               # [B*S, Cp] (pad lanes = -1e30)
    tgt = tgt_ref[...]                                # [B*S, 1]  (-1 where masked/ignored)
    wcls = w_ref[...]                                 # [1, Cp]   (pad lanes = 0)

    zmax = jnp.max(z, axis=-1, keepdims=True)
    zs = z - zmax
    ez = jnp.exp(zs)                                  # single EUP exp pass
    denom = jnp.sum(ez, axis=-1, keepdims=True)
    logp = zs - jnp.log(denom)
    # softmax activations reuse ez; lane-dense [B*S, 128] store
    act_ref[...] = ez * pl.reciprocal(denom, approx=True)

    lanes = jax.lax.broadcasted_iota(jnp.int32, z.shape, 1)
    onehot = (lanes == tgt).astype(f32)
    valid = (tgt != -1).astype(f32)
    # fused class reduction:
    #   (1-ls)*(-w_y*logp_y) + (ls/C)*(-sum_c w_c*logp_c)
    # = -sum_c w_c*((1-ls)*onehot_c + ls/C)*logp_c
    coeff = wcls * ((1.0 - label_smoothing) * onehot + (label_smoothing / n_classes))
    ce = -jnp.sum(coeff * logp, axis=-1, keepdims=True) * valid     # [B*S, 1]
    cat_sum = jnp.sum(ce, keepdims=True)              # already mask-weighted via tgt=-1

    type_loss = (cat_sum + spec_sum) * inv_n
    total_loss = lambda_val * value_loss + lambda_type * type_loss

    # ---- similarity metrics -----------------------------------------------
    s_num = jnp.sum(sim * m_num, keepdims=True)
    s_img = jnp.sum(sim * m_img, keepdims=True)
    s_txt = jnp.sum(sim * m_txt, keepdims=True)
    s_spec = jnp.sum(sim * m_spec, keepdims=True)
    sim_all = (s_num + s_img + s_txt + s_spec) * (0.5 * inv_n)
    # NOTE: no zero guards on the per-segment denominators — same NaN behaviour
    # as the PyTorch module when a segment has no selected tokens.
    sim_num = s_num * pl.reciprocal(jnp.sum(m_num, keepdims=True), approx=True)
    sim_img = s_img * pl.reciprocal(jnp.sum(m_img, keepdims=True), approx=True)
    sim_txt = s_txt * pl.reciprocal(jnp.sum(m_txt, keepdims=True), approx=True)
    sim_spec = s_spec * inv_n

    # ---- pack the 8 scalars into one (1, 8) output (single writeback) -----
    vals = (total_loss, value_loss, type_loss,
            sim_num, sim_img, sim_txt, sim_all, sim_spec)
    lane8 = jax.lax.broadcasted_iota(jnp.int32, (1, len(vals)), 1)
    packed = jnp.zeros((1, len(vals)), f32)
    for k, v in enumerate(vals):
        packed = packed + jnp.where(lane8 == k, v, f32(0.0))
    scal_ref[...] = packed


# ---------------------------------------------------------------------------
# Wrapper: layout plumbing (padding / packing) + pallas_call
# ---------------------------------------------------------------------------
def multimodal_recon_loss(inputs, recon, padding_mask, selected_mask, *,
                          class_weights, label_smoothing,
                          lambda_val_loss, lambda_type_loss):
    S_num, S_img, S_txt = (int(s) for s in inputs["splits"])
    S = S_num + S_img + S_txt
    mask = (padding_mask * selected_mask).astype(jnp.float32)          # [B, S]
    B = mask.shape[0]
    C = recon["types_cat"].shape[-1]

    d_num = inputs["numerics"].shape[-1]
    d_img = inputs["images"].shape[-1]
    d_txt = inputs["texts"].shape[-1]
    d_spec = inputs["types_spec"].shape[-1]
    Dp = _LANE * (-(-max(d_num, d_img, d_txt, d_spec) // _LANE))       # lane-dense
    Cp = _LANE * (-(-C // _LANE))

    def pad_feat(x):
        return jnp.pad(x.astype(jnp.float32), ((0, 0), (0, 0), (0, Dp - x.shape[-1])))

    # slabs: [B, 2S, Dp], row order = [numerics | images | texts | types_spec]
    slab_in = jnp.concatenate(
        [pad_feat(inputs["numerics"]), pad_feat(inputs["images"]),
         pad_feat(inputs["texts"]), pad_feat(inputs["types_spec"])], axis=1)
    slab_rec = jnp.concatenate(
        [pad_feat(recon["numerics"]), pad_feat(recon["images"]),
         pad_feat(recon["texts"]), pad_feat(recon["types_spec"])], axis=1)

    # per-row 1/D factors in slab row order
    inv_d = jnp.concatenate([
        jnp.full((S_num,), 1.0 / d_num, jnp.float32),
        jnp.full((S_img,), 1.0 / d_img, jnp.float32),
        jnp.full((S_txt,), 1.0 / d_txt, jnp.float32)])
    # torch: cat([loss_num, loss_txt, loss_img]) * mask([num|img|txt] layout)
    # -> permute mask columns into slab row order [num | img | txt]:
    vmask = jnp.concatenate([mask[:, :S_num],
                             mask[:, S_num + S_txt:],
                             mask[:, S_num:S_num + S_txt]], axis=1)    # [B, S]
    zS = jnp.zeros((B, S), jnp.float32)
    wv = jnp.concatenate([vmask * inv_d[None, :], zS], axis=1)         # [B, 2S]
    wt = jnp.concatenate([zS, mask * (1.0 / d_spec)], axis=1)          # [B, 2S]
    m_num = jnp.concatenate([mask[:, :S_num],
                             jnp.zeros((B, 2 * S - S_num), jnp.float32)], axis=1)
    m_img = jnp.concatenate([jnp.zeros((B, S_num), jnp.float32),
                             mask[:, S_num:S_num + S_img],
                             jnp.zeros((B, S_txt + S), jnp.float32)], axis=1)
    m_txt = jnp.concatenate([jnp.zeros((B, S_num + S_img), jnp.float32),
                             mask[:, S_num + S_img:], zS], axis=1)
    m_spec = jnp.concatenate([zS, mask], axis=1)
    aux = jnp.stack([wv, wt, m_num, m_img, m_txt, m_spec], axis=0)     # [6, B, 2S]

    # logits / targets / class weights, lane-dense along classes
    logits = recon["types_cat"].astype(jnp.float32).reshape(B * S, C)
    logits_pad = jnp.pad(logits, ((0, 0), (0, Cp - C)), constant_values=_NEG)
    tgt = jnp.where(mask > 0, inputs["types_cat"].astype(jnp.int32), -1)
    tgt = tgt.reshape(B * S, 1)
    w_pad = jnp.pad(class_weights.astype(jnp.float32).reshape(1, C),
                    ((0, 0), (0, Cp - C)))

    kernel = functools.partial(
        _recon_loss_kernel,
        n_classes=float(C),
        label_smoothing=float(label_smoothing),
        lambda_val=float(lambda_val_loss),
        lambda_type=float(lambda_type_loss),
    )

    vmem = pl.BlockSpec(memory_space=pltpu.MemorySpace.VMEM)
    scalars, act_pad = pl.pallas_call(
        kernel,
        out_shape=(jax.ShapeDtypeStruct((1, 8), jnp.float32),
                   jax.ShapeDtypeStruct((B * S, Cp), jnp.float32)),
        in_specs=[vmem] * 6,
        out_specs=(vmem, vmem),
    )(slab_in, slab_rec, aux, logits_pad, tgt, w_pad)

    act = act_pad[:, :C].reshape(B, S, C)

    # TODO(synk): torch does dynamic boolean gathers targets[mask>0] /
    # softmax(logits)[mask>0]; dynamic output shapes are not expressible on
    # TPU, so we return the dense arrays plus the mask.
    extras = dict(
        val_loss=scalars[0, 1],
        type_loss=scalars[0, 2],
        type_cat_y=inputs["types_cat"].astype(jnp.int32),
        type_cat_activations=act,
        mask=mask,
        similarity_numerics=scalars[0, 3],
        similarity_images=scalars[0, 4],
        similarity_texts=scalars[0, 5],
        similarity_all=scalars[0, 6],
        similarity_types_spec=scalars[0, 7],
    )
    return scalars[0, 0], extras


# ---------------------------------------------------------------------------
# Pure-JAX reference (mirrors the PyTorch forward) for the correctness check
# ---------------------------------------------------------------------------
def _reference(inputs, recon, padding_mask, selected_mask, class_weights,
               label_smoothing, lambda_val, lambda_type):
    mask = (padding_mask * selected_mask).astype(jnp.float32)
    n_masked = mask.sum()
    S_num, S_img, S_txt = inputs["splits"]

    def mse_(a, b):
        return jnp.mean((a - b) ** 2, -1)

    loss_num = mse_(inputs["numerics"], recon["numerics"])
    loss_img = mse_(inputs["images"], recon["images"])
    loss_txt = mse_(inputs["texts"], recon["texts"])
    value_loss = jnp.concatenate([loss_num, loss_txt, loss_img], -1)
    value_loss = (value_loss * mask).sum() / n_masked

    loss_spec = mse_(inputs["types_spec"], recon["types_spec"])
    logits = recon["types_cat"]
    C = logits.shape[-1]
    logp = jax.nn.log_softmax(logits, -1)
    tgt = inputs["types_cat"]
    onehot = jax.nn.one_hot(tgt, C, dtype=jnp.float32)
    w = class_weights[None, None, :]
    nll = -(w * onehot).sum(-1) * (logp * onehot).sum(-1)
    smooth = -(w * logp).sum(-1)
    valid = (tgt != -1).astype(jnp.float32)
    loss_cat = ((1 - label_smoothing) * nll + label_smoothing / C * smooth) * valid
    type_loss = ((loss_cat + loss_spec) * mask).sum() / n_masked
    total = lambda_val * value_loss + lambda_type * type_loss

    def cs(a, b):
        return (a * b).sum(-1) / jnp.sqrt(
            jnp.maximum((a * a).sum(-1) * (b * b).sum(-1), 1e-16))

    sim_num = cs(recon["numerics"], inputs["numerics"])
    sim_img = cs(recon["images"], inputs["images"])
    sim_txt = cs(recon["texts"], inputs["texts"])
    sim_spec = cs(recon["types_spec"], inputs["types_spec"])
    sim_cat = jnp.concatenate([sim_num, sim_img, sim_txt], -1)
    sim_all = jnp.stack([sim_cat, sim_spec], -1)
    sim_all = (sim_all * mask[..., None]).sum() / (n_masked * 2)

    m_num = mask[:, :S_num]
    m_img = mask[:, S_num:S_num + S_img]
    m_txt = mask[:, S_num + S_img:]
    return dict(
        total=total, val_loss=value_loss, type_loss=type_loss,
        sim_num=(sim_num * m_num).sum() / m_num.sum(),
        sim_img=(sim_img * m_img).sum() / m_img.sum(),
        sim_txt=(sim_txt * m_txt).sum() / m_txt.sum(),
        sim_all=sim_all,
        sim_spec=(sim_spec * mask).sum() / n_masked,
        act=jax.nn.softmax(logits, -1),
    )


# ---------------------------------------------------------------------------
if __name__ == "__main__":
    key = jax.random.PRNGKey(0)
    B = 2
    # unequal splits to exercise the [num|txt|img]-vs-[num|img|txt] permutation
    S_num, S_img, S_txt = 8, 12, 4
    S = S_num + S_img + S_txt
    D_num, D_img, D_txt, D_spec = 32, 48, 32, 16
    C = 8

    ks = jax.random.split(key, 12)
    inputs = dict(
        splits=(S_num, S_img, S_txt),
        numerics=jax.random.normal(ks[0], (B, S_num, D_num), jnp.float32),
        images=jax.random.normal(ks[1], (B, S_img, D_img), jnp.float32),
        texts=jax.random.normal(ks[2], (B, S_txt, D_txt), jnp.float32),
        types_spec=jax.random.normal(ks[3], (B, S, D_spec), jnp.float32),
        types_cat=jax.random.randint(ks[4], (B, S), 0, C, jnp.int32),
    )
    recon = dict(
        numerics=jax.random.normal(ks[5], (B, S_num, D_num), jnp.float32),
        images=jax.random.normal(ks[6], (B, S_img, D_img), jnp.float32),
        texts=jax.random.normal(ks[7], (B, S_txt, D_txt), jnp.float32),
        types_spec=jax.random.normal(ks[8], (B, S, D_spec), jnp.float32),
        types_cat=jax.random.normal(ks[9], (B, S, C), jnp.float32),
    )
    padding_mask = jnp.ones((B, S), jnp.float32)
    selected_mask = (jax.random.uniform(ks[10], (B, S)) < 0.6).astype(jnp.float32)
    # ensure at least one selected token per modality segment (avoid 0/0)
    selected_mask = (selected_mask.at[:, 0].set(1.0)
                     .at[:, S_num].set(1.0)
                     .at[:, S_num + S_img].set(1.0))

    # deterministic synthetic class-frequency counts (stand-in for the CSV)
    counts = jnp.array([5.0, 0.0, 3.0, 10.0, 1.0, 7.0, 2.0, 4.0], jnp.float32)
    loss_weight_smoothing = 0.3
    w = (1.0 / jnp.maximum(counts, 1.0)) ** (1.0 - loss_weight_smoothing)
    w = jnp.where(counts == 0, 0.0, w)
    w = w / w.sum()

    label_smoothing = 0.1
    lambda_val_loss = 1.0
    lambda_type_loss = 0.5

    total_loss, extras = multimodal_recon_loss(
        inputs, recon, padding_mask, selected_mask,
        class_weights=w, label_smoothing=label_smoothing,
        lambda_val_loss=lambda_val_loss, lambda_type_loss=lambda_type_loss,
    )
    jax.block_until_ready(total_loss)

    ref = _reference(inputs, recon, padding_mask, selected_mask, w,
                     label_smoothing, lambda_val_loss, lambda_type_loss)

    # loss path uses exact reciprocals -> tight tolerance
    np.testing.assert_allclose(np.asarray(total_loss), np.asarray(ref["total"]),
                               rtol=2e-3, atol=1e-5)
    np.testing.assert_allclose(np.asarray(extras["val_loss"]), np.asarray(ref["val_loss"]),
                               rtol=2e-3, atol=1e-5)
    np.testing.assert_allclose(np.asarray(extras["type_loss"]), np.asarray(ref["type_loss"]),
                               rtol=2e-3, atol=1e-5)
    # similarities / softmax use EUP approx reciprocal -> slightly looser rtol
    np.testing.assert_allclose(np.asarray(extras["similarity_numerics"]),
                               np.asarray(ref["sim_num"]), rtol=5e-3, atol=1e-5)
    np.testing.assert_allclose(np.asarray(extras["similarity_images"]),
                               np.asarray(ref["sim_img"]), rtol=5e-3, atol=1e-5)
    np.testing.assert_allclose(np.asarray(extras["similarity_texts"]),
                               np.asarray(ref["sim_txt"]), rtol=5e-3, atol=1e-5)
    np.testing.assert_allclose(np.asarray(extras["similarity_all"]),
                               np.asarray(ref["sim_all"]), rtol=5e-3, atol=1e-5)
    np.testing.assert_allclose(np.asarray(extras["similarity_types_spec"]),
                               np.asarray(ref["sim_spec"]), rtol=5e-3, atol=1e-5)
    np.testing.assert_allclose(np.asarray(extras["type_cat_activations"]),
                               np.asarray(ref["act"]), rtol=5e-3, atol=1e-5)

    print("KERNEL_OK")
</pallas_src>

<mosaic_0001>
module attributes {stable_mosaic.version = 11 : i64} {
  func.func @_recon_loss_kernel(%arg0: memref<2x48x128xf32, #tpu.memory_space<vmem>>, %arg1: memref<2x48x128xf32, #tpu.memory_space<vmem>>, %arg2: memref<6x2x48xf32, #tpu.memory_space<vmem>>, %arg3: memref<48x128xf32, #tpu.memory_space<vmem>>, %arg4: memref<48x1xi32, #tpu.memory_space<vmem>>, %arg5: memref<1x128xf32, #tpu.memory_space<vmem>>, %arg6: memref<1x8xf32, #tpu.memory_space<vmem>>, %arg7: memref<48x128xf32, #tpu.memory_space<vmem>>) attributes {dimension_semantics = [], scalar_prefetch = 0 : i64, scratch_operands = 0 : i64, tpu.core_type = #tpu.core_type<tc>} {
    %c0 = arith.constant 0 : index
    %c0_0 = arith.constant 0 : index
    %c0_1 = arith.constant 0 : index
    %0 = vector.load %arg0[%c0, %c0_0, %c0_1] : memref<2x48x128xf32, #tpu.memory_space<vmem>>, vector<2x48x128xf32>
    %c0_2 = arith.constant 0 : index
    %c0_3 = arith.constant 0 : index
    %c0_4 = arith.constant 0 : index
    %1 = vector.load %arg1[%c0_2, %c0_3, %c0_4] : memref<2x48x128xf32, #tpu.memory_space<vmem>>, vector<2x48x128xf32>
    %2 = arith.subf %0, %1 : vector<2x48x128xf32>
    %3 = arith.mulf %2, %2 : vector<2x48x128xf32>
    %cst = arith.constant dense<0.000000e+00> : vector<2x48xf32>
    %4 = vector.multi_reduction <add>, %3, %cst [2] : vector<2x48x128xf32> to vector<2x48xf32>
    %5 = arith.mulf %0, %1 : vector<2x48x128xf32>
    %cst_5 = arith.constant dense<0.000000e+00> : vector<2x48xf32>
    %6 = vector.multi_reduction <add>, %5, %cst_5 [2] : vector<2x48x128xf32> to vector<2x48xf32>
    %7 = arith.mulf %0, %0 : vector<2x48x128xf32>
    %cst_6 = arith.constant dense<0.000000e+00> : vector<2x48xf32>
    %8 = vector.multi_reduction <add>, %7, %cst_6 [2] : vector<2x48x128xf32> to vector<2x48xf32>
    %9 = arith.mulf %1, %1 : vector<2x48x128xf32>
    %cst_7 = arith.constant dense<0.000000e+00> : vector<2x48xf32>
    %10 = vector.multi_reduction <add>, %9, %cst_7 [2] : vector<2x48x128xf32> to vector<2x48xf32>
    %c0_8 = arith.constant 0 : index
    %c0_9 = arith.constant 0 : index
    %c0_10 = arith.constant 0 : index
    %11 = vector.load %arg2[%c0_8, %c0_9, %c0_10] : memref<6x2x48xf32, #tpu.memory_space<vmem>>, vector<1x2x48xf32>
    %12 = vector.shape_cast %11 : vector<1x2x48xf32> to vector<2x48xf32>
    %c1 = arith.constant 1 : index
    %c0_11 = arith.constant 0 : index
    %c0_12 = arith.constant 0 : index
    %13 = vector.load %arg2[%c1, %c0_11, %c0_12] : memref<6x2x48xf32, #tpu.memory_space<vmem>>, vector<1x2x48xf32>
    %14 = vector.shape_cast %13 : vector<1x2x48xf32> to vector<2x48xf32>
    %c2 = arith.constant 2 : index
    %c0_13 = arith.constant 0 : index
    %c0_14 = arith.constant 0 : index
    %15 = vector.load %arg2[%c2, %c0_13, %c0_14] : memref<6x2x48xf32, #tpu.memory_space<vmem>>, vector<1x2x48xf32>
    %16 = vector.shape_cast %15 : vector<1x2x48xf32> to vector<2x48xf32>
    %c3 = arith.constant 3 : index
    %c0_15 = arith.constant 0 : index
    %c0_16 = arith.constant 0 : index
    %17 = vector.load %arg2[%c3, %c0_15, %c0_16] : memref<6x2x48xf32, #tpu.memory_space<vmem>>, vector<1x2x48xf32>
    %18 = vector.shape_cast %17 : vector<1x2x48xf32> to vector<2x48xf32>
    %c4 = arith.constant 4 : index
    %c0_17 = arith.constant 0 : index
    %c0_18 = arith.constant 0 : index
    %19 = vector.load %arg2[%c4, %c0_17, %c0_18] : memref<6x2x48xf32, #tpu.memory_space<vmem>>, vector<1x2x48xf32>
    %20 = vector.shape_cast %19 : vector<1x2x48xf32> to vector<2x48xf32>
    %c5 = arith.constant 5 : index
    %c0_19 = arith.constant 0 : index
    %c0_20 = arith.constant 0 : index
    %21 = vector.load %arg2[%c5, %c0_19, %c0_20] : memref<6x2x48xf32, #tpu.memory_space<vmem>>, vector<1x2x48xf32>
    %22 = vector.shape_cast %21 : vector<1x2x48xf32> to vector<2x48xf32>
    %23 = arith.mulf %8, %10 : vector<2x48xf32>
    %cst_21 = arith.constant 1.000000e-16 : f32
    %24 = vector.broadcast %cst_21 : f32 to vector<2x48xf32>
    %25 = arith.maximumf %23, %24 : vector<2x48xf32>
    %26 = math.rsqrt %25 : vector<2x48xf32>
    %27 = arith.mulf %6, %26 : vector<2x48xf32>
    %28 = vector.shape_cast %22 : vector<2x48xf32> to vector<1x2x48xf32>
    %cst_22 = arith.constant dense<0.000000e+00> : vector<1xf32>
    %29 = vector.multi_reduction <add>, %28, %cst_22 [1, 2] : vector<1x2x48xf32> to vector<1xf32>
    %30 = vector.shape_cast %29 : vector<1xf32> to vector<1x1x1xf32>
    %31 = vector.extract %30[0, 0, 0] : f32 from vector<1x1x1xf32>
    %32 = vector.broadcast %31 : f32 to vector<1x1xf32>
    %cst_23 = arith.constant 1.000000e+00 : f32
    %33 = vector.broadcast %cst_23 : f32 to vector<1x1xf32>
    %34 = arith.divf %33, %32 : vector<1x1xf32>
    %35 = arith.mulf %4, %12 : vector<2x48xf32>
    %36 = vector.shape_cast %35 : vector<2x48xf32> to vector<1x2x48xf32>
    %cst_24 = arith.constant dense<0.000000e+00> : vector<1xf32>
    %37 = vector.multi_reduction <add>, %36, %cst_24 [1, 2] : vector<1x2x48xf32> to vector<1xf32>
    %38 = vector.shape_cast %37 : vector<1xf32> to vector<1x1x1xf32>
    %39 = vector.extract %38[0, 0, 0] : f32 from vector<1x1x1xf32>
    %40 = vector.broadcast %39 : f32 to vector<1x1xf32>
    %41 = arith.mulf %40, %34 : vector<1x1xf32>
    %42 = arith.mulf %4, %14 : vector<2x48xf32>
    %43 = vector.shape_cast %42 : vector<2x48xf32> to vector<1x2x48xf32>
    %cst_25 = arith.constant dense<0.000000e+00> : vector<1xf32>
    %44 = vector.multi_reduction <add>, %43, %cst_25 [1, 2] : vector<1x2x48xf32> to vector<1xf32>
    %45 = vector.shape_cast %44 : vector<1xf32> to vector<1x1x1xf32>
    %46 = vector.extract %45[0, 0, 0] : f32 from vector<1x1x1xf32>
    %47 = vector.broadcast %46 : f32 to vector<1x1xf32>
    %c0_26 = arith.constant 0 : index
    %c0_27 = arith.constant 0 : index
    %48 = vector.load %arg3[%c0_26, %c0_27] : memref<48x128xf32, #tpu.memory_space<vmem>>, vector<48x128xf32>
    %c0_28 = arith.constant 0 : index
    %c0_29 = arith.constant 0 : index
    %49 = vector.load %arg4[%c0_28, %c0_29] : memref<48x1xi32, #tpu.memory_space<vmem>>, vector<48x1xi32>
    %c0_30 = arith.constant 0 : index
    %c0_31 = arith.constant 0 : index
    %50 = vector.load %arg5[%c0_30, %c0_31] : memref<1x128xf32, #tpu.memory_space<vmem>>, vector<1x128xf32>
    %cst_32 = arith.constant dense<0xFF800000> : vector<48xf32>
    %51 = vector.multi_reduction <maximumf>, %48, %cst_32 [1] : vector<48x128xf32> to vector<48xf32>
    %52 = vector.shape_cast %51 : vector<48xf32> to vector<48x1xf32>
    %53 = vector.broadcast %52 : vector<48x1xf32> to vector<48x128xf32>
    %54 = arith.subf %48, %53 : vector<48x128xf32>
    %55 = math.exp %54 : vector<48x128xf32>
    %cst_33 = arith.constant dense<0.000000e+00> : vector<48xf32>
    %56 = vector.multi_reduction <add>, %55, %cst_33 [1] : vector<48x128xf32> to vector<48xf32>
    %57 = vector.shape_cast %56 : vector<48xf32> to vector<48x1xf32>
    %58 = math.log %57 : vector<48x1xf32>
    %59 = vector.broadcast %58 : vector<48x1xf32> to vector<48x128xf32>
    %60 = arith.subf %54, %59 : vector<48x128xf32>
    %61 = tpu.reciprocal %57 {approx = true} : vector<48x1xf32> -> vector<48x1xf32>
    %62 = vector.broadcast %61 : vector<48x1xf32> to vector<48x128xf32>
    %63 = arith.mulf %55, %62 : vector<48x128xf32>
    %c0_34 = arith.constant 0 : index
    %c0_35 = arith.constant 0 : index
    %64 = vector.load %arg7[%c0_34, %c0_35] : memref<48x128xf32, #tpu.memory_space<vmem>>, vector<48x128xf32>
    tpu.vector_store %arg7[%c0_34, %c0_35], %63 {strides = array<i32>} : memref<48x128xf32, #tpu.memory_space<vmem>>, vector<48x128xf32>,
    %65 = tpu.iota {dimensions = array<i32: 1>} : vector<48x128xi32>
    %66 = vector.broadcast %49 : vector<48x1xi32> to vector<48x128xi32>
    %67 = arith.cmpi eq, %65, %66 : vector<48x128xi32>
    %68 = arith.extui %67 : vector<48x128xi1> to vector<48x128xi32>
    %69 = arith.sitofp %68 : vector<48x128xi32> to vector<48x128xf32>
    %c-1_i32 = arith.constant -1 : i32
    %70 = vector.broadcast %c-1_i32 : i32 to vector<48x1xi32>
    %71 = arith.cmpi ne, %49, %70 : vector<48x1xi32>
    %72 = arith.extui %71 : vector<48x1xi1> to vector<48x1xi32>
    %73 = arith.sitofp %72 : vector<48x1xi32> to vector<48x1xf32>
    %cst_36 = arith.constant 0.899999976 : f32
    %74 = vector.broadcast %cst_36 : f32 to vector<48x128xf32>
    %75 = arith.mulf %74, %69 : vector<48x128xf32>
    %cst_37 = arith.constant 1.250000e-02 : f32
    %76 = vector.broadcast %cst_37 : f32 to vector<48x128xf32>
    %77 = arith.addf %75, %76 : vector<48x128xf32>
    %78 = vector.broadcast %50 : vector<1x128xf32> to vector<48x128xf32>
    %79 = arith.mulf %78, %77 : vector<48x128xf32>
    %80 = arith.mulf %79, %60 : vector<48x128xf32>
    %cst_38 = arith.constant dense<0.000000e+00> : vector<48xf32>
    %81 = vector.multi_reduction <add>, %80, %cst_38 [1] : vector<48x128xf32> to vector<48xf32>
    %82 = vector.shape_cast %81 : vector<48xf32> to vector<48x1xf32>
    %cst_39 = arith.constant 0.000000e+00 : f32
    %83 = vector.broadcast %cst_39 : f32 to vector<48x1xf32>
    %84 = arith.subf %83, %82 : vector<48x1xf32>
    %85 = arith.mulf %84, %73 : vector<48x1xf32>
    %86 = vector.shape_cast %85 : vector<48x1xf32> to vector<1x48x1xf32>
    %cst_40 = arith.constant dense<0.000000e+00> : vector<1xf32>
    %87 = vector.multi_reduction <add>, %86, %cst_40 [1, 2] : vector<1x48x1xf32> to vector<1xf32>
    %88 = vector.shape_cast %87 : vector<1xf32> to vector<1x1x1xf32>
    %89 = vector.extract %88[0, 0, 0] : f32 from vector<1x1x1xf32>
    %90 = vector.broadcast %89 : f32 to vector<1x1xf32>
    %91 = arith.addf %90, %47 : vector<1x1xf32>
    %92 = arith.mulf %91, %34 : vector<1x1xf32>
    %cst_41 = arith.constant 1.000000e+00 : f32
    %93 = vector.broadcast %cst_41 : f32 to vector<1x1xf32>
    %94 = arith.mulf %93, %41 : vector<1x1xf32>
    %cst_42 = arith.constant 5.000000e-01 : f32
    %95 = vector.broadcast %cst_42 : f32 to vector<1x1xf32>
    %96 = arith.mulf %95, %92 : vector<1x1xf32>
    %97 = arith.addf %94, %96 : vector<1x1xf32>
    %98 = arith.mulf %27, %16 : vector<2x48xf32>
    %99 = vector.shape_cast %98 : vector<2x48xf32> to vector<1x2x48xf32>
    %cst_43 = arith.constant dense<0.000000e+00> : vector<1xf32>
    %100 = vector.multi_reduction <add>, %99, %cst_43 [1, 2] : vector<1x2x48xf32> to vector<1xf32>
    %101 = vector.shape_cast %100 : vector<1xf32> to vector<1x1x1xf32>
    %102 = vector.extract %101[0, 0, 0] : f32 from vector<1x1x1xf32>
    %103 = vector.broadcast %102 : f32 to vector<1x1xf32>
    %104 = arith.mulf %27, %18 : vector<2x48xf32>
    %105 = vector.shape_cast %104 : vector<2x48xf32> to vector<1x2x48xf32>
    %cst_44 = arith.constant dense<0.000000e+00> : vector<1xf32>
    %106 = vector.multi_reduction <add>, %105, %cst_44 [1, 2] : vector<1x2x48xf32> to vector<1xf32>
    %107 = vector.shape_cast %106 : vector<1xf32> to vector<1x1x1xf32>
    %108 = vector.extract %107[0, 0, 0] : f32 from vector<1x1x1xf32>
    %109 = vector.broadcast %108 : f32 to vector<1x1xf32>
    %110 = arith.mulf %27, %20 : vector<2x48xf32>
    %111 = vector.shape_cast %110 : vector<2x48xf32> to vector<1x2x48xf32>
    %cst_45 = arith.constant dense<0.000000e+00> : vector<1xf32>
    %112 = vector.multi_reduction <add>, %111, %cst_45 [1, 2] : vector<1x2x48xf32> to vector<1xf32>
    %113 = vector.shape_cast %112 : vector<1xf32> to vector<1x1x1xf32>
    %114 = vector.extract %113[0, 0, 0] : f32 from vector<1x1x1xf32>
    %115 = vector.broadcast %114 : f32 to vector<1x1xf32>
    %116 = arith.mulf %27, %22 : vector<2x48xf32>
    %117 = vector.shape_cast %116 : vector<2x48xf32> to vector<1x2x48xf32>
    %cst_46 = arith.constant dense<0.000000e+00> : vector<1xf32>
    %118 = vector.multi_reduction <add>, %117, %cst_46 [1, 2] : vector<1x2x48xf32> to vector<1xf32>
    %119 = vector.shape_cast %118 : vector<1xf32> to vector<1x1x1xf32>
    %120 = vector.extract %119[0, 0, 0] : f32 from vector<1x1x1xf32>
    %121 = vector.broadcast %120 : f32 to vector<1x1xf32>
    %122 = arith.addf %103, %109 : vector<1x1xf32>
    %123 = arith.addf %122, %115 : vector<1x1xf32>
    %124 = arith.addf %123, %121 : vector<1x1xf32>
    %cst_47 = arith.constant 5.000000e-01 : f32
    %125 = vector.broadcast %cst_47 : f32 to vector<1x1xf32>
    %126 = arith.mulf %125, %34 : vector<1x1xf32>
    %127 = arith.mulf %124, %126 : vector<1x1xf32>
    %128 = vector.shape_cast %16 : vector<2x48xf32> to vector<1x2x48xf32>
    %cst_48 = arith.constant dense<0.000000e+00> : vector<1xf32>
    %129 = vector.multi_reduction <add>, %128, %cst_48 [1, 2] : vector<1x2x48xf32> to vector<1xf32>
    %130 = vector.shape_cast %129 : vector<1xf32> to vector<1x1x1xf32>
    %131 = vector.extract %130[0, 0, 0] : f32 from vector<1x1x1xf32>
    %132 = vector.broadcast %131 : f32 to vector<1x1xf32>
    %133 = tpu.reciprocal %132 {approx = true} : vector<1x1xf32> -> vector<1x1xf32>
    %134 = arith.mulf %103, %133 : vector<1x1xf32>
    %135 = vector.shape_cast %18 : vector<2x48xf32> to vector<1x2x48xf32>
    %cst_49 = arith.constant dense<0.000000e+00> : vector<1xf32>
    %136 = vector.multi_reduction <add>, %135, %cst_49 [1, 2] : vector<1x2x48xf32> to vector<1xf32>
    %137 = vector.shape_cast %136 : vector<1xf32> to vector<1x1x1xf32>
    %138 = vector.extract %137[0, 0, 0] : f32 from vector<1x1x1xf32>
    %139 = vector.broadcast %138 : f32 to vector<1x1xf32>
    %140 = tpu.reciprocal %139 {approx = true} : vector<1x1xf32> -> vector<1x1xf32>
    %141 = arith.mulf %109, %140 : vector<1x1xf32>
    %142 = vector.shape_cast %20 : vector<2x48xf32> to vector<1x2x48xf32>
    %cst_50 = arith.constant dense<0.000000e+00> : vector<1xf32>
    %143 = vector.multi_reduction <add>, %142, %cst_50 [1, 2] : vector<1x2x48xf32> to vector<1xf32>
    %144 = vector.shape_cast %143 : vector<1xf32> to vector<1x1x1xf32>
    %145 = vector.extract %144[0, 0, 0] : f32 from vector<1x1x1xf32>
    %146 = vector.broadcast %145 : f32 to vector<1x1xf32>
    %147 = tpu.reciprocal %146 {approx = true} : vector<1x1xf32> -> vector<1x1xf32>
    %148 = arith.mulf %115, %147 : vector<1x1xf32>
    %149 = arith.mulf %121, %34 : vector<1x1xf32>
    %150 = tpu.iota {dimensions = array<i32: 1>} : vector<1x8xi32>
    %cst_51 = arith.constant 0.000000e+00 : f32
    %151 = vector.broadcast %cst_51 : f32 to vector<1x8xf32>
    %c0_i32 = arith.constant 0 : i32
    %152 = vector.broadcast %c0_i32 : i32 to vector<1x8xi32>
    %153 = arith.cmpi eq, %150, %152 : vector<1x8xi32>
    %cst_52 = arith.constant 0.000000e+00 : f32
    %154 = vector.shape_cast %97 : vector<1x1xf32> to vector<1x1xf32>
    %155 = vector.broadcast %154 : vector<1x1xf32> to vector<1x8xf32>
    %156 = vector.broadcast %cst_52 : f32 to vector<1x8xf32>
    %157 = arith.select %153, %155, %156 : vector<1x8xi1>, vector<1x8xf32>
    %158 = arith.addf %151, %157 : vector<1x8xf32>
    %c1_i32 = arith.constant 1 : i32
    %159 = vector.broadcast %c1_i32 : i32 to vector<1x8xi32>
    %160 = arith.cmpi eq, %150, %159 : vector<1x8xi32>
    %cst_53 = arith.constant 0.000000e+00 : f32
    %161 = vector.shape_cast %41 : vector<1x1xf32> to vector<1x1xf32>
    %162 = vector.broadcast %161 : vector<1x1xf32> to vector<1x8xf32>
    %163 = vector.broadcast %cst_53 : f32 to vector<1x8xf32>
    %164 = arith.select %160, %162, %163 : vector<1x8xi1>, vector<1x8xf32>
    %165 = arith.addf %158, %164 : vector<1x8xf32>
    %c2_i32 = arith.constant 2 : i32
    %166 = vector.broadcast %c2_i32 : i32 to vector<1x8xi32>
    %167 = arith.cmpi eq, %150, %166 : vector<1x8xi32>
    %cst_54 = arith.constant 0.000000e+00 : f32
    %168 = vector.shape_cast %92 : vector<1x1xf32> to vector<1x1xf32>
    %169 = vector.broadcast %168 : vector<1x1xf32> to vector<1x8xf32>
    %170 = vector.broadcast %cst_54 : f32 to vector<1x8xf32>
    %171 = arith.select %167, %169, %170 : vector<1x8xi1>, vector<1x8xf32>
    %172 = arith.addf %165, %171 : vector<1x8xf32>
    %c3_i32 = arith.constant 3 : i32
    %173 = vector.broadcast %c3_i32 : i32 to vector<1x8xi32>
    %174 = arith.cmpi eq, %150, %173 : vector<1x8xi32>
    %cst_55 = arith.constant 0.000000e+00 : f32
    %175 = vector.shape_cast %134 : vector<1x1xf32> to vector<1x1xf32>
    %176 = vector.broadcast %175 : vector<1x1xf32> to vector<1x8xf32>
    %177 = vector.broadcast %cst_55 : f32 to vector<1x8xf32>
    %178 = arith.select %174, %176, %177 : vector<1x8xi1>, vector<1x8xf32>
    %179 = arith.addf %172, %178 : vector<1x8xf32>
    %c4_i32 = arith.constant 4 : i32
    %180 = vector.broadcast %c4_i32 : i32 to vector<1x8xi32>
    %181 = arith.cmpi eq, %150, %180 : vector<1x8xi32>
    %cst_56 = arith.constant 0.000000e+00 : f32
    %182 = vector.shape_cast %141 : vector<1x1xf32> to vector<1x1xf32>
    %183 = vector.broadcast %182 : vector<1x1xf32> to vector<1x8xf32>
    %184 = vector.broadcast %cst_56 : f32 to vector<1x8xf32>
    %185 = arith.select %181, %183, %184 : vector<1x8xi1>, vector<1x8xf32>
    %186 = arith.addf %179, %185 : vector<1x8xf32>
    %c5_i32 = arith.constant 5 : i32
    %187 = vector.broadcast %c5_i32 : i32 to vector<1x8xi32>
    %188 = arith.cmpi eq, %150, %187 : vector<1x8xi32>
    %cst_57 = arith.constant 0.000000e+00 : f32
    %189 = vector.shape_cast %148 : vector<1x1xf32> to vector<1x1xf32>
    %190 = vector.broadcast %189 : vector<1x1xf32> to vector<1x8xf32>
    %191 = vector.broadcast %cst_57 : f32 to vector<1x8xf32>
    %192 = arith.select %188, %190, %191 : vector<1x8xi1>, vector<1x8xf32>
    %193 = arith.addf %186, %192 : vector<1x8xf32>
    %c6_i32 = arith.constant 6 : i32
    %194 = vector.broadcast %c6_i32 : i32 to vector<1x8xi32>
    %195 = arith.cmpi eq, %150, %194 : vector<1x8xi32>
    %cst_58 = arith.constant 0.000000e+00 : f32
    %196 = vector.shape_cast %127 : vector<1x1xf32> to vector<1x1xf32>
    %197 = vector.broadcast %196 : vector<1x1xf32> to vector<1x8xf32>
    %198 = vector.broadcast %cst_58 : f32 to vector<1x8xf32>
    %199 = arith.select %195, %197, %198 : vector<1x8xi1>, vector<1x8xf32>
    %200 = arith.addf %193, %199 : vector<1x8xf32>
    %c7_i32 = arith.constant 7 : i32
    %201 = vector.broadcast %c7_i32 : i32 to vector<1x8xi32>
    %202 = arith.cmpi eq, %150, %201 : vector<1x8xi32>
    %cst_59 = arith.constant 0.000000e+00 : f32
    %203 = vector.shape_cast %149 : vector<1x1xf32> to vector<1x1xf32>
    %204 = vector.broadcast %203 : vector<1x1xf32> to vector<1x8xf32>
    %205 = vector.broadcast %cst_59 : f32 to vector<1x8xf32>
    %206 = arith.select %202, %204, %205 : vector<1x8xi1>, vector<1x8xf32>
    %207 = arith.addf %200, %206 : vector<1x8xf32>
    %c0_60 = arith.constant 0 : index
    %c0_61 = arith.constant 0 : index
    %208 = vector.load %arg6[%c0_60, %c0_61] : memref<1x8xf32, #tpu.memory_space<vmem>>, vector<1x8xf32>
    tpu.vector_store %arg6[%c0_60, %c0_61], %207 {strides = array<i32>} : memref<1x8xf32, #tpu.memory_space<vmem>>, vector<1x8xf32>,
    return
  }
}

</mosaic_0001>

<llo_original>
// kernel: tpu_custom_call.1
$region0: #{tpu_custom_call.1}
  #allocation0 [shape = 'u32[]', space=smem, size = 0x4, offset = 0x4, fixed_abs, tag = 'smem constant byte address 0x4 - core index']
  #allocation1 [shape = 'u32[72,128]{1,0:T(1,128)}', space=vmem, size = 0x9000, scoped, tag = 'internal scratch']
  %s0 = inlined_call_operand.hbm [shape: f32[2,48,128], index: 0, kind: input, shape index: {}]
  %s1 = inlined_call_operand.hbm [shape: f32[2,48,128], index: 1, kind: input, shape index: {}]
  %s2 = inlined_call_operand.hbm [shape: f32[6,2,48], index: 2, kind: input, shape index: {}]
  %s3 = inlined_call_operand.vmem [shape: f32[48,128], index: 3, kind: input, shape index: {}]
  %s4 = inlined_call_operand.vmem [shape: s32[48,1], index: 4, kind: input, shape index: {}]
  %s5 = inlined_call_operand.vmem [shape: f32[1,128], index: 5, kind: input, shape index: {}]
  %s6 = inlined_call_operand.hbm [shape: f32[1,8], index: 6, kind: output, shape index: {0}]
  %s7 = inlined_call_operand.hbm [shape: f32[48,128], index: 7, kind: output, shape index: {1}]
  %8 = xla_tuple %s6, %s7
  %s9 = sld [smem:[#allocation0]]
  $region54: #{tpu_custom_call.1} parent=0
    _
  %s11 = ssub.s32 1, %s9
  %s12 = scalar_select 0, %s11, %s9
  $region1: #{tpu_custom_call.1} parent=0
    #allocation2 [shape = 'u8[49152]{0}', space=vmem, size = 0xc000, scoped, tag = 'input window, operand 0, single buffered']
    #allocation3 [shape = 's32[1]{0}', space=sflag, size = 0x4, scoped, tag = 'scoped memory for tpu_custom_call.1']
    #allocation4 [shape = 's32[1]{0}', space=sflag, size = 0x4, scoped, tag = 'scoped memory for tpu_custom_call.1']
    #allocation5 [shape = 'u8[49152]{0}', space=vmem, size = 0xc000, scoped, tag = 'input window, operand 1, single buffered']
    #allocation6 [shape = 's32[1]{0}', space=sflag, size = 0x4, scoped, tag = 'scoped memory for tpu_custom_call.1']
    #allocation7 [shape = 'u8[6144]{0}', space=vmem, size = 0x1800, scoped, tag = 'input window, operand 2, single buffered']
    #allocation8 [shape = 'u8[512]{0}', space=vmem, size = 0x400, scoped, tag = 'output window, operand 0, single buffered']
    #allocation9 [shape = 'u8[24576]{0}', space=vmem, size = 0x6000, scoped, tag = 'output window, operand 1, single buffered']
    #allocation10 [shape = 's32[1]{0}', space=sflag, size = 0x4, scoped, tag = 'scoped memory for tpu_custom_call.1']
    %13 = vsyncpa [#allocation3], 0
    %14 = vsyncpa [#allocation6], 0
    %15 = vsyncpa [#allocation4], 0
    %16 = vsyncpa [#allocation10], 0
    // Predicated region
    $region2: #{tpu_custom_call.1} parent=1 // pred_check
      _
    $region3: #{tpu_custom_call.1} parent=1 // pred_check_branch
      %18 = sbr.rel (0) target = $region5
    $region4: #{tpu_custom_call.1} parent=1 // pred_region
      %20 = vsyncadd [#allocation3], 0
      %s21 = sshll.u32 %s0, 4
      %s22 = int_to_ptr.hbm [resolvable:$true] %s21
      %s23 = sshll.u32 [#allocation2], 4
      %s24 = int_to_ptr.vmem [resolvable:$true] %s23
      %29 = dma.hbm_to_vmem [thread:$0]  %s22, 1536, %s24, [#allocation3], 128, 128, 8
    $region5: #{tpu_custom_call.1} parent=1 // pred_fallthru
      _
    // Predicated region
    $region6: #{tpu_custom_call.1} parent=1 // pred_check
      _
    $region7: #{tpu_custom_call.1} parent=1 // pred_check_branch
      %31 = sbr.rel (0) target = $region9
    $region8: #{tpu_custom_call.1} parent=1 // pred_region
      %33 = vsyncadd [#allocation6], 0
      %s34 = sshll.u32 %s1, 4
      %s35 = int_to_ptr.hbm [resolvable:$true] %s34
      %s36 = sshll.u32 [#allocation5], 4
      %s37 = int_to_ptr.vmem [resolvable:$true] %s36
      %42 = dma.hbm_to_vmem [thread:$0]  %s35, 1536, %s37, [#allocation6], 128, 128, 8
    $region9: #{tpu_custom_call.1} parent=1 // pred_fallthru
      _
    // Predicated region
    $region10: #{tpu_custom_call.1} parent=1 // pred_check
      _
    $region11: #{tpu_custom_call.1} parent=1 // pred_check_branch
      %44 = sbr.rel (0) target = $region13
    $region12: #{tpu_custom_call.1} parent=1 // pred_region
      %46 = vsyncadd [#allocation6], 0
      %s47 = sshll.u32 %s2, 4
      %s48 = int_to_ptr.hbm [resolvable:$true] %s47
      %s49 = sshll.u32 [#allocation7], 4
      %s50 = int_to_ptr.vmem [resolvable:$true] %s49
      %55 = dma.hbm_to_vmem [thread:$0]  %s48, 192, %s50, [#allocation6], 32, 32, 2
    $region13: #{tpu_custom_call.1} parent=1 // pred_fallthru
      _
    // Predicated region
    $region14: #{tpu_custom_call.1} parent=1 // pred_check
      _
    $region15: #{tpu_custom_call.1} parent=1 // pred_check_branch
      %57 = sbr.rel (0) target = $region17
    $region16: #{tpu_custom_call.1} parent=1 // pred_region
      _
    $region17: #{tpu_custom_call.1} parent=1 // pred_fallthru
      _
    // Predicated region
    $region18: #{tpu_custom_call.1} parent=1 // pred_check
      _
    $region19: #{tpu_custom_call.1} parent=1 // pred_check_branch
      %59 = sbr.rel (0) target = $region21
    $region20: #{tpu_custom_call.1} parent=1 // pred_region
      _
    $region21: #{tpu_custom_call.1} parent=1 // pred_fallthru
      _
    // Predicated region
    $region22: #{tpu_custom_call.1} parent=1 // pred_check
      _
    $region23: #{tpu_custom_call.1} parent=1 // pred_check_branch
      %61 = sbr.rel (0) target = $region25
    $region24: #{tpu_custom_call.1} parent=1 // pred_region
      _
    $region25: #{tpu_custom_call.1} parent=1 // pred_fallthru
      _
    // Predicated region
    $region26: #{tpu_custom_call.1} parent=1 // pred_check
      _
    $region27: #{tpu_custom_call.1} parent=1 // pred_check_branch
      %63 = sbr.rel (0) target = $region29
    $region28: #{tpu_custom_call.1} parent=1 // pred_region
      %65 = dma.done [#allocation3], 1536
    $region29: #{tpu_custom_call.1} parent=1 // pred_fallthru
      _
    // Predicated region
    $region30: #{tpu_custom_call.1} parent=1 // pred_check
      _
    $region31: #{tpu_custom_call.1} parent=1 // pred_check_branch
      %67 = sbr.rel (0) target = $region33
    $region32: #{tpu_custom_call.1} parent=1 // pred_region
      %69 = dma.done [#allocation6], 1536
    $region33: #{tpu_custom_call.1} parent=1 // pred_fallthru
      _
    // Predicated region
    $region34: #{tpu_custom_call.1} parent=1 // pred_check
      _
    $region35: #{tpu_custom_call.1} parent=1 // pred_check_branch
      %71 = sbr.rel (0) target = $region37
    $region36: #{tpu_custom_call.1} parent=1 // pred_region
      %73 = dma.done [#allocation6], 192
    $region37: #{tpu_custom_call.1} parent=1 // pred_fallthru
      _
    %v74 = vld [vmem:[#allocation2] sm:$0xff]
    %v75 = vld [vmem:[#allocation2 + $0x8] sm:$0xff]
    %v76 = vld [vmem:[#allocation2 + $0x10] sm:$0xff]
    %v77 = vld [vmem:[#allocation2 + $0x18] sm:$0xff]
    %v78 = vld [vmem:[#allocation2 + $0x20] sm:$0xff]
    %v79 = vld [vmem:[#allocation2 + $0x28] sm:$0xff]
    %v80 = vld [vmem:[#allocation2 + $0x30] sm:$0xff]
    %v81 = vld [vmem:[#allocation2 + $0x38] sm:$0xff]
    %v82 = vld [vmem:[#allocation2 + $0x40] sm:$0xff]
    %v83 = vld [vmem:[#allocation2 + $0x48] sm:$0xff]
    %v84 = vld [vmem:[#allocation2 + $0x50] sm:$0xff]
    %v85 = vld [vmem:[#allocation2 + $0x58] sm:$0xff]
    %v86 = vld [vmem:[#allocation5] sm:$0xff]
    %v87 = vld [vmem:[#allocation5 + $0x8] sm:$0xff]
    %v88 = vld [vmem:[#allocation5 + $0x10] sm:$0xff]
    %v89 = vld [vmem:[#allocation5 + $0x18] sm:$0xff]
    %v90 = vld [vmem:[#allocation5 + $0x20] sm:$0xff]
    %v91 = vld [vmem:[#allocation5 + $0x28] sm:$0xff]
    %v92 = vld [vmem:[#allocation5 + $0x30] sm:$0xff]
    %v93 = vld [vmem:[#allocation5 + $0x38] sm:$0xff]
    %v94 = vld [vmem:[#allocation5 + $0x40] sm:$0xff]
    %v95 = vld [vmem:[#allocation5 + $0x48] sm:$0xff]
    %v96 = vld [vmem:[#allocation5 + $0x50] sm:$0xff]
    %v97 = vld [vmem:[#allocation5 + $0x58] sm:$0xff]
    %v98 = vsub.f32 %v74, %v86
    %v99 = vsub.f32 %v75, %v87
    %v100 = vsub.f32 %v76, %v88
    %v101 = vsub.f32 %v77, %v89
    %v102 = vsub.f32 %v78, %v90
    %v103 = vsub.f32 %v79, %v91
    %v104 = vsub.f32 %v80, %v92
    %v105 = vsub.f32 %v81, %v93
    %v106 = vsub.f32 %v82, %v94
    %v107 = vsub.f32 %v83, %v95
    %v108 = vsub.f32 %v84, %v96
    %v109 = vsub.f32 %v85, %v97
    %v110 = vmul.f32 %v98, %v98
    %v111 = vmul.f32 %v99, %v99
    %v112 = vmul.f32 %v100, %v100
    %v113 = vmul.f32 %v101, %v101
    %v114 = vmul.f32 %v102, %v102
    %v115 = vmul.f32 %v103, %v103
    %v116 = vmul.f32 %v104, %v104
    %v117 = vmul.f32 %v105, %v105
    %v118 = vmul.f32 %v106, %v106
    %v119 = vmul.f32 %v107, %v107
    %v120 = vmul.f32 %v108, %v108
    %v121 = vmul.f32 %v109, %v109
    %122 = vadd.xlane.f32.xlu0 %v110
    %v123 = vpop.xlane.xlu0 %122
    %124 = vadd.xlane.f32.xlu0 %v111
    %v125 = vpop.xlane.xlu0 %124
    %126 = vadd.xlane.f32.xlu0 %v112
    %v127 = vpop.xlane.xlu0 %126
    %128 = vadd.xlane.f32.xlu0 %v113
    %v129 = vpop.xlane.xlu0 %128
    %130 = vadd.xlane.f32.xlu0 %v114
    %v131 = vpop.xlane.xlu0 %130
    %132 = vadd.xlane.f32.xlu0 %v115
    %v133 = vpop.xlane.xlu0 %132
    %134 = vadd.xlane.f32.xlu0 %v116
    %v135 = vpop.xlane.xlu0 %134
    %136 = vadd.xlane.f32.xlu0 %v117
    %v137 = vpop.xlane.xlu0 %136
    %138 = vadd.xlane.f32.xlu0 %v118
    %v139 = vpop.xlane.xlu0 %138
    %140 = vadd.xlane.f32.xlu0 %v119
    %v141 = vpop.xlane.xlu0 %140
    %142 = vadd.xlane.f32.xlu0 %v120
    %v143 = vpop.xlane.xlu0 %142
    %144 = vadd.xlane.f32.xlu0 %v121
    %v145 = vpop.xlane.xlu0 %144
    %v146 = vmul.f32 %v74, %v86
    %v147 = vmul.f32 %v75, %v87
    %v148 = vmul.f32 %v76, %v88
    %v149 = vmul.f32 %v77, %v89
    %v150 = vmul.f32 %v78, %v90
    %v151 = vmul.f32 %v79, %v91
    %v152 = vmul.f32 %v80, %v92
    %v153 = vmul.f32 %v81, %v93
    %v154 = vmul.f32 %v82, %v94
    %v155 = vmul.f32 %v83, %v95
    %v156 = vmul.f32 %v84, %v96
    %v157 = vmul.f32 %v85, %v97
    %158 = vadd.xlane.f32.xlu0 %v146
    %v159 = vpop.xlane.xlu0 %158
    %160 = vadd.xlane.f32.xlu0 %v147
    %v161 = vpop.xlane.xlu0 %160
    %162 = vadd.xlane.f32.xlu0 %v148
    %v163 = vpop.xlane.xlu0 %162
    %164 = vadd.xlane.f32.xlu0 %v149
    %v165 = vpop.xlane.xlu0 %164
    %166 = vadd.xlane.f32.xlu0 %v150
    %v167 = vpop.xlane.xlu0 %166
    %168 = vadd.xlane.f32.xlu0 %v151
    %v169 = vpop.xlane.xlu0 %168
    %170 = vadd.xlane.f32.xlu0 %v152
    %v171 = vpop.xlane.xlu0 %170
    %172 = vadd.xlane.f32.xlu0 %v153
    %v173 = vpop.xlane.xlu0 %172
    %174 = vadd.xlane.f32.xlu0 %v154
    %v175 = vpop.xlane.xlu0 %174
    %176 = vadd.xlane.f32.xlu0 %v155
    %v177 = vpop.xlane.xlu0 %176
    %178 = vadd.xlane.f32.xlu0 %v156
    %v179 = vpop.xlane.xlu0 %178
    %180 = vadd.xlane.f32.xlu0 %v157
    %v181 = vpop.xlane.xlu0 %180
    %v182 = vmul.f32 %v74, %v74
    %v183 = vmul.f32 %v75, %v75
    %v184 = vmul.f32 %v76, %v76
    %v185 = vmul.f32 %v77, %v77
    %v186 = vmul.f32 %v78, %v78
    %v187 = vmul.f32 %v79, %v79
    %v188 = vmul.f32 %v80, %v80
    %v189 = vmul.f32 %v81, %v81
    %v190 = vmul.f32 %v82, %v82
    %v191 = vmul.f32 %v83, %v83
    %v192 = vmul.f32 %v84, %v84
    %v193 = vmul.f32 %v85, %v85
    %194 = vadd.xlane.f32.xlu0 %v182
    %v195 = vpop.xlane.xlu0 %194
    %196 = vadd.xlane.f32.xlu0 %v183
    %v197 = vpop.xlane.xlu0 %196
    %198 = vadd.xlane.f32.xlu0 %v184
    %v199 = vpop.xlane.xlu0 %198
    %200 = vadd.xlane.f32.xlu0 %v185
    %v201 = vpop.xlane.xlu0 %200
    %202 = vadd.xlane.f32.xlu0 %v186
    %v203 = vpop.xlane.xlu0 %202
    %204 = vadd.xlane.f32.xlu0 %v187
    %v205 = vpop.xlane.xlu0 %204
    %206 = vadd.xlane.f32.xlu0 %v188
    %v207 = vpop.xlane.xlu0 %206
    %208 = vadd.xlane.f32.xlu0 %v189
    %v209 = vpop.xlane.xlu0 %208
    %210 = vadd.xlane.f32.xlu0 %v190
    %v211 = vpop.xlane.xlu0 %210
    %212 = vadd.xlane.f32.xlu0 %v191
    %v213 = vpop.xlane.xlu0 %212
    %214 = vadd.xlane.f32.xlu0 %v192
    %v215 = vpop.xlane.xlu0 %214
    %216 = vadd.xlane.f32.xlu0 %v193
    %v217 = vpop.xlane.xlu0 %216
    %v218 = vmul.f32 %v86, %v86
    %v219 = vmul.f32 %v87, %v87
    %v220 = vmul.f32 %v88, %v88
    %v221 = vmul.f32 %v89, %v89
    %v222 = vmul.f32 %v90, %v90
    %v223 = vmul.f32 %v91, %v91
    %v224 = vmul.f32 %v92, %v92
    %v225 = vmul.f32 %v93, %v93
    %v226 = vmul.f32 %v94, %v94
    %v227 = vmul.f32 %v95, %v95
    %v228 = vmul.f32 %v96, %v96
    %v229 = vmul.f32 %v97, %v97
    %230 = vadd.xlane.f32.xlu0 %v218
    %v231 = vpop.xlane.xlu0 %230
    %232 = vadd.xlane.f32.xlu0 %v219
    %v233 = vpop.xlane.xlu0 %232
    %234 = vadd.xlane.f32.xlu0 %v220
    %v235 = vpop.xlane.xlu0 %234
    %236 = vadd.xlane.f32.xlu0 %v221
    %v237 = vpop.xlane.xlu0 %236
    %238 = vadd.xlane.f32.xlu0 %v222
    %v239 = vpop.xlane.xlu0 %238
    %240 = vadd.xlane.f32.xlu0 %v223
    %v241 = vpop.xlane.xlu0 %240
    %242 = vadd.xlane.f32.xlu0 %v224
    %v243 = vpop.xlane.xlu0 %242
    %244 = vadd.xlane.f32.xlu0 %v225
    %v245 = vpop.xlane.xlu0 %244
    %246 = vadd.xlane.f32.xlu0 %v226
    %v247 = vpop.xlane.xlu0 %246
    %248 = vadd.xlane.f32.xlu0 %v227
    %v249 = vpop.xlane.xlu0 %248
    %250 = vadd.xlane.f32.xlu0 %v228
    %v251 = vpop.xlane.xlu0 %250
    %252 = vadd.xlane.f32.xlu0 %v229
    %v253 = vpop.xlane.xlu0 %252
    %v254 = vld [vmem:[#allocation7] sm:$0x3]
    %s255 = scalar_lea.vmem [#allocation7], 2
    %v256 = vld [vmem:[%s255] sm:$0x3]
    %s257 = scalar_lea.vmem [#allocation7], 4
    %v258 = vld [vmem:[%s257] sm:$0x3]
    %s259 = scalar_lea.vmem [#allocation7], 6
    %v260 = vld [vmem:[%s259] sm:$0x3]
    %s261 = scalar_lea.vmem [#allocation7], 8
    %v262 = vld [vmem:[%s261] sm:$0x3]
    %s263 = scalar_lea.vmem [#allocation7], 10
    %v264 = vld [vmem:[%s263] sm:$0x3]
    %v265 = vmul.f32 %v195, %v231
    %v266 = vmul.f32 %v197, %v233
    %v267 = vmul.f32 %v199, %v235
    %v268 = vmul.f32 %v201, %v237
    %v269 = vmul.f32 %v203, %v239
    %v270 = vmul.f32 %v205, %v241
    %v271 = vmul.f32 %v207, %v243
    %v272 = vmul.f32 %v209, %v245
    %v273 = vmul.f32 %v211, %v247
    %v274 = vmul.f32 %v213, %v249
    %v275 = vmul.f32 %v215, %v251
    %v276 = vmul.f32 %v217, %v253
    %v277 = vmax.f32 %v265, 1e-16
    %v278 = vmax.f32 %v266, 1e-16
    %v279 = vmax.f32 %v267, 1e-16
    %v280 = vmax.f32 %v268, 1e-16
    %v281 = vmax.f32 %v269, 1e-16
    %v282 = vmax.f32 %v270, 1e-16
    %v283 = vmax.f32 %v271, 1e-16
    %v284 = vmax.f32 %v272, 1e-16
    %v285 = vmax.f32 %v273, 1e-16
    %v286 = vmax.f32 %v274, 1e-16
    %v287 = vmax.f32 %v275, 1e-16
    %v288 = vmax.f32 %v276, 1e-16
    %v289 = vrsqrt.pop %v277
    %v290 = vmul.f32 %v289, %v277
    %v291 = vmul.f32 %v290, %v289
    %v292 = vmul.f32 0.5, %v291
    %v293 = vsub.f32 1.5, %v292
    %v294 = vmul.f32 %v289, %v293
    %vm295 = vweird.f32 %v277
    %vm296 = vweird.f32 %v289
    %vm297 = vmor %vm295, %vm296
    %v298 = vsel %vm297, %v289, %v294
    %v299 = vrsqrt.pop %v278
    %v300 = vmul.f32 %v299, %v278
    %v301 = vmul.f32 %v300, %v299
    %v302 = vmul.f32 0.5, %v301
    %v303 = vsub.f32 1.5, %v302
    %v304 = vmul.f32 %v299, %v303
    %vm305 = vweird.f32 %v278
    %vm306 = vweird.f32 %v299
    %vm307 = vmor %vm305, %vm306
    %v308 = vsel %vm307, %v299, %v304
    %v309 = vrsqrt.pop %v279
    %v310 = vmul.f32 %v309, %v279
    %v311 = vmul.f32 %v310, %v309
    %v312 = vmul.f32 0.5, %v311
    %v313 = vsub.f32 1.5, %v312
    %v314 = vmul.f32 %v309, %v313
    %vm315 = vweird.f32 %v279
    %vm316 = vweird.f32 %v309
    %vm317 = vmor %vm315, %vm316
    %v318 = vsel %vm317, %v309, %v314
    %v319 = vrsqrt.pop %v280
    %v320 = vmul.f32 %v319, %v280
    %v321 = vmul.f32 %v320, %v319
    %v322 = vmul.f32 0.5, %v321
    %v323 = vsub.f32 1.5, %v322
    %v324 = vmul.f32 %v319, %v323
    %vm325 = vweird.f32 %v280
    %vm326 = vweird.f32 %v319
    %vm327 = vmor %vm325, %vm326
    %v328 = vsel %vm327, %v319, %v324
    %v329 = vrsqrt.pop %v281
    %v330 = vmul.f32 %v329, %v281
    %v331 = vmul.f32 %v330, %v329
    %v332 = vmul.f32 0.5, %v331
    %v333 = vsub.f32 1.5, %v332
    %v334 = vmul.f32 %v329, %v333
    %vm335 = vweird.f32 %v281
    %vm336 = vweird.f32 %v329
    %vm337 = vmor %vm335, %vm336
    %v338 = vsel %vm337, %v329, %v334
    %v339 = vrsqrt.pop %v282
    %v340 = vmul.f32 %v339, %v282
    %v341 = vmul.f32 %v340, %v339
    %v342 = vmul.f32 0.5, %v341
    %v343 = vsub.f32 1.5, %v342
    %v344 = vmul.f32 %v339, %v343
    %vm345 = vweird.f32 %v282
    %vm346 = vweird.f32 %v339
    %vm347 = vmor %vm345, %vm346
    %v348 = vsel %vm347, %v339, %v344
    %v349 = vrsqrt.pop %v283
    %v350 = vmul.f32 %v349, %v283
    %v351 = vmul.f32 %v350, %v349
    %v352 = vmul.f32 0.5, %v351
    %v353 = vsub.f32 1.5, %v352
    %v354 = vmul.f32 %v349, %v353
    %vm355 = vweird.f32 %v283
    %vm356 = vweird.f32 %v349
    %vm357 = vmor %vm355, %vm356
    %v358 = vsel %vm357, %v349, %v354
    %v359 = vrsqrt.pop %v284
    %v360 = vmul.f32 %v359, %v284
    %v361 = vmul.f32 %v360, %v359
    %v362 = vmul.f32 0.5, %v361
    %v363 = vsub.f32 1.5, %v362
    %v364 = vmul.f32 %v359, %v363
    %vm365 = vweird.f32 %v284
    %vm366 = vweird.f32 %v359
    %vm367 = vmor %vm365, %vm366
    %v368 = vsel %vm367, %v359, %v364
    %v369 = vrsqrt.pop %v285
    %v370 = vmul.f32 %v369, %v285
    %v371 = vmul.f32 %v370, %v369
    %v372 = vmul.f32 0.5, %v371
    %v373 = vsub.f32 1.5, %v372
    %v374 = vmul.f32 %v369, %v373
    %vm375 = vweird.f32 %v285
    %vm376 = vweird.f32 %v369
    %vm377 = vmor %vm375, %vm376
    %v378 = vsel %vm377, %v369, %v374
    %v379 = vrsqrt.pop %v286
    %v380 = vmul.f32 %v379, %v286
    %v381 = vmul.f32 %v380, %v379
    %v382 = vmul.f32 0.5, %v381
    %v383 = vsub.f32 1.5, %v382
    %v384 = vmul.f32 %v379, %v383
    %vm385 = vweird.f32 %v286
    %vm386 = vweird.f32 %v379
    %vm387 = vmor %vm385, %vm386
    %v388 = vsel %vm387, %v379, %v384
    %v389 = vrsqrt.pop %v287
    %v390 = vmul.f32 %v389, %v287
    %v391 = vmul.f32 %v390, %v389
    %v392 = vmul.f32 0.5, %v391
    %v393 = vsub.f32 1.5, %v392
    %v394 = vmul.f32 %v389, %v393
    %vm395 = vweird.f32 %v287
    %vm396 = vweird.f32 %v389
    %vm397 = vmor %vm395, %vm396
    %v398 = vsel %vm397, %v389, %v394
    %v399 = vrsqrt.pop %v288
    %v400 = vmul.f32 %v399, %v288
    %v401 = vmul.f32 %v400, %v399
    %v402 = vmul.f32 0.5, %v401
    %v403 = vsub.f32 1.5, %v402
    %v404 = vmul.f32 %v399, %v403
    %vm405 = vweird.f32 %v288
    %vm406 = vweird.f32 %v399
    %vm407 = vmor %vm405, %vm406
    %v408 = vsel %vm407, %v399, %v404
    %v409 = vmul.f32 %v159, %v298
    %v410 = vmul.f32 %v161, %v308
    %v411 = vmul.f32 %v163, %v318
    %v412 = vmul.f32 %v165, %v328
    %v413 = vmul.f32 %v167, %v338
    %v414 = vmul.f32 %v169, %v348
    %v415 = vmul.f32 %v171, %v358
    %v416 = vmul.f32 %v173, %v368
    %v417 = vmul.f32 %v175, %v378
    %v418 = vmul.f32 %v177, %v388
    %v419 = vmul.f32 %v179, %v398
    %v420 = vmul.f32 %v181, %v408
    %vm421 = vcmask 386048
    %v422 = vsel %vm421, %v264, 0.0
    %423 = vadd.xlane.f32.xlu0 %v422
    %v424 = vpop.xlane.xlu0 %423
    %v425 = vrot.slane %v424, 4
    %v426 = vadd.f32 %v424, %v425
    %v427 = vrot.slane %v426, 2
    %v428 = vadd.f32 %v426, %v427
    %v429 = vrot.slane %v428, 1
    %v430 = vadd.f32 %v428, %v429
    %s431 = vtos %v430
    %v432 = vstv %s431
    %v433 = vrcp.pop %v432
    %v434 = vmul.f32 %v432, %v433
    %v435 = vsub.f32 1.0, %v434
    %v436 = vmul.f32 %v433, %v435
    %v437 = vadd.f32 %v433, %v436
    %vm438 = vweird.f32 %v432
    %vm439 = vweird.f32 %v433
    %vm440 = vmor %vm438, %vm439
    %v441 = vsel %vm440, %v433, %v437
    %v442 = vand.u32 2147483647, %v432
    %vm443 = vcmp.eq.f32.partialorder %v442, 8.507059e+37
    %v444 = vand.u32 %v432, 2147483648
    %v445 = vor.u32 1.1754944e-38, %v444
    %v446 = vsel %vm443, %v445, %v441
    %v447 = vmul.f32 1.0, %v446
    %v449 = vperm.slane %v254, 0
    %v450 = vlaneseq
    %v451 = vshrl.u32 %v450, 7
    %453 = vset.pattern.permute.xlu0 %v451
    %454 = vperm.xlu0 %453, %v449
    %v455 = vpop.permute.xlu0 %454
    %v456 = vlaneseq
    %v457 = vshrl.u32 %v456, 7
    %v458 = vadd.s32 %v457, 8
    %459 = vset.pattern.permute.xlu0 %v458
    %460 = vperm.xlu0 %459, %v449
    %v461 = vpop.permute.xlu0 %460
    %v462 = vlaneseq
    %v463 = vshrl.u32 %v462, 7
    %v464 = vadd.s32 %v463, 16
    %465 = vset.pattern.permute.xlu0 %v464
    %466 = vperm.xlu0 %465, %v449
    %v467 = vpop.permute.xlu0 %466
    %v468 = vlaneseq
    %v469 = vshrl.u32 %v468, 7
    %v470 = vadd.s32 %v469, 24
    %471 = vset.pattern.permute.xlu0 %v470
    %472 = vperm.xlu0 %471, %v449
    %v473 = vpop.permute.xlu0 %472
    %v474 = vlaneseq
    %v475 = vshrl.u32 %v474, 7
    %v476 = vadd.s32 %v475, 32
    %477 = vset.pattern.permute.xlu0 %v476
    %478 = vperm.xlu0 %477, %v449
    %v479 = vpop.permute.xlu0 %478
    %v480 = vlaneseq
    %v481 = vshrl.u32 %v480, 7
    %v482 = vadd.s32 %v481, 40
    %483 = vset.pattern.permute.xlu0 %v482
    %484 = vperm.xlu0 %483, %v449
    %v485 = vpop.permute.xlu0 %484
    %v486 = vperm.slane %v254, 1
    %v487 = vlaneseq
    %v488 = vshrl.u32 %v487, 7
    %490 = vset.pattern.permute.xlu0 %v488
    %491 = vperm.xlu0 %490, %v486
    %v492 = vpop.permute.xlu0 %491
    %v493 = vlaneseq
    %v494 = vshrl.u32 %v493, 7
    %v495 = vadd.s32 %v494, 8
    %496 = vset.pattern.permute.xlu0 %v495
    %497 = vperm.xlu0 %496, %v486
    %v498 = vpop.permute.xlu0 %497
    %v499 = vlaneseq
    %v500 = vshrl.u32 %v499, 7
    %v501 = vadd.s32 %v500, 16
    %502 = vset.pattern.permute.xlu0 %v501
    %503 = vperm.xlu0 %502, %v486
    %v504 = vpop.permute.xlu0 %503
    %v505 = vlaneseq
    %v506 = vshrl.u32 %v505, 7
    %v507 = vadd.s32 %v506, 24
    %508 = vset.pattern.permute.xlu0 %v507
    %509 = vperm.xlu0 %508, %v486
    %v510 = vpop.permute.xlu0 %509
    %v511 = vlaneseq
    %v512 = vshrl.u32 %v511, 7
    %v513 = vadd.s32 %v512, 32
    %514 = vset.pattern.permute.xlu0 %v513
    %515 = vperm.xlu0 %514, %v486
    %v516 = vpop.permute.xlu0 %515
    %v517 = vlaneseq
    %v518 = vshrl.u32 %v517, 7
    %v519 = vadd.s32 %v518, 40
    %520 = vset.pattern.permute.xlu0 %v519
    %521 = vperm.xlu0 %520, %v486
    %v522 = vpop.permute.xlu0 %521
    %v535 = vmul.f32 %v123, %v455
    %v536 = vmul.f32 %v125, %v461
    %v537 = vmul.f32 %v127, %v467
    %v538 = vmul.f32 %v129, %v473
    %v539 = vmul.f32 %v131, %v479
    %v540 = vmul.f32 %v133, %v485
    %v541 = vmul.f32 %v135, %v492
    %v542 = vmul.f32 %v137, %v498
    %v543 = vmul.f32 %v139, %v504
    %v544 = vmul.f32 %v141, %v510
    %v545 = vmul.f32 %v143, %v516
    %v546 = vmul.f32 %v145, %v522
    %559 = vset.pattern.permute.xlu0 0
    %560 = vperm.xlu0 %559, %v535
    %v561 = vpop.permute.xlu0 %560
    %562 = vset.pattern.permute.xlu0 0
    %563 = vperm.xlu0 %562, %v536
    %v564 = vpop.permute.xlu0 %563
    %565 = vset.pattern.permute.xlu0 0
    %566 = vperm.xlu0 %565, %v537
    %v567 = vpop.permute.xlu0 %566
    %568 = vset.pattern.permute.xlu0 0
    %569 = vperm.xlu0 %568, %v538
    %v570 = vpop.permute.xlu0 %569
    %571 = vset.pattern.permute.xlu0 0
    %572 = vperm.xlu0 %571, %v539
    %v573 = vpop.permute.xlu0 %572
    %574 = vset.pattern.permute.xlu0 0
    %575 = vperm.xlu0 %574, %v540
    %v576 = vpop.permute.xlu0 %575
    %577 = vset.pattern.permute.xlu0 0
    %578 = vperm.xlu0 %577, %v541
    %v579 = vpop.permute.xlu0 %578
    %580 = vset.pattern.permute.xlu0 0
    %581 = vperm.xlu0 %580, %v542
    %v582 = vpop.permute.xlu0 %581
    %583 = vset.pattern.permute.xlu0 0
    %584 = vperm.xlu0 %583, %v543
    %v585 = vpop.permute.xlu0 %584
    %586 = vset.pattern.permute.xlu0 0
    %587 = vperm.xlu0 %586, %v544
    %v588 = vpop.permute.xlu0 %587
    %589 = vset.pattern.permute.xlu0 0
    %590 = vperm.xlu0 %589, %v545
    %v591 = vpop.permute.xlu0 %590
    %592 = vset.pattern.permute.xlu0 0
    %593 = vperm.xlu0 %592, %v546
    %v594 = vpop.permute.xlu0 %593
    %v595 = vlaneseq
    %v596 = vand.u32 %v595, 127
    %v597 = vperm.slane %v561, %v596
    %v598 = vadd.s32 %v596, 4294967288
    %v599 = vperm.slane %v564, %v598
    %vm600 = vcmask 130112
    %v601 = vsel %vm600, %v599, %v597
    %v602 = vadd.s32 %v596, 4294967280
    %v603 = vperm.slane %v567, %v602
    %vm604 = vcmask 195712
    %v605 = vsel %vm604, %v603, %v601
    %v606 = vadd.s32 %v596, 4294967272
    %v607 = vperm.slane %v570, %v606
    %vm608 = vcmask 261312
    %v609 = vsel %vm608, %v607, %v605
    %v610 = vadd.s32 %v596, 4294967264
    %v611 = vperm.slane %v573, %v610
    %vm612 = vcmask 326912
    %v613 = vsel %vm612, %v611, %v609
    %v614 = vadd.s32 %v596, 4294967256
    %v615 = vperm.slane %v576, %v614
    %vm616 = vcmask 392512
    %v617 = vsel %vm616, %v615, %v613
    %v618 = vperm.slane %v579, %v596
    %v619 = vperm.slane %v582, %v598
    %v620 = vsel %vm600, %v619, %v618
    %v621 = vperm.slane %v585, %v602
    %v622 = vsel %vm604, %v621, %v620
    %v623 = vperm.slane %v588, %v606
    %v624 = vsel %vm608, %v623, %v622
    %v625 = vperm.slane %v591, %v610
    %v626 = vsel %vm612, %v625, %v624
    %v627 = vperm.slane %v594, %v614
    %v628 = vsel %vm616, %v627, %v626
    %vm629 = vcmask 1041409
    %v630 = vsel %vm629, %v628, %v617
    %v632 = vsel %vm421, %v630, 0.0
    %633 = vadd.xlane.f32.xlu0 %v632
    %v634 = vpop.xlane.xlu0 %633
    %v635 = vrot.slane %v634, 4
    %v636 = vadd.f32 %v634, %v635
    %v637 = vrot.slane %v636, 2
    %v638 = vadd.f32 %v636, %v637
    %v639 = vrot.slane %v638, 1
    %v640 = vadd.f32 %v638, %v639
    %s641 = vtos %v640
    %v642 = vstv %s641
    %v643 = vmul.f32 %v642, %v447
    %v645 = vperm.slane %v256, 0
    %v646 = vlaneseq
    %v647 = vshrl.u32 %v646, 7
    %649 = vset.pattern.permute.xlu0 %v647
    %650 = vperm.xlu0 %649, %v645
    %v651 = vpop.permute.xlu0 %650
    %v652 = vlaneseq
    %v653 = vshrl.u32 %v652, 7
    %v654 = vadd.s32 %v653, 8
    %655 = vset.pattern.permute.xlu0 %v654
    %656 = vperm.xlu0 %655, %v645
    %v657 = vpop.permute.xlu0 %656
    %v658 = vlaneseq
    %v659 = vshrl.u32 %v658, 7
    %v660 = vadd.s32 %v659, 16
    %661 = vset.pattern.permute.xlu0 %v660
    %662 = vperm.xlu0 %661, %v645
    %v663 = vpop.permute.xlu0 %662
    %v664 = vlaneseq
    %v665 = vshrl.u32 %v664, 7
    %v666 = vadd.s32 %v665, 24
    %667 = vset.pattern.permute.xlu0 %v666
    %668 = vperm.xlu0 %667, %v645
    %v669 = vpop.permute.xlu0 %668
    %v670 = vlaneseq
    %v671 = vshrl.u32 %v670, 7
    %v672 = vadd.s32 %v671, 32
    %673 = vset.pattern.permute.xlu0 %v672
    %674 = vperm.xlu0 %673, %v645
    %v675 = vpop.permute.xlu0 %674
    %v676 = vlaneseq
    %v677 = vshrl.u32 %v676, 7
    %v678 = vadd.s32 %v677, 40
    %679 = vset.pattern.permute.xlu0 %v678
    %680 = vperm.xlu0 %679, %v645
    %v681 = vpop.permute.xlu0 %680
    %v682 = vperm.slane %v256, 1
    %v683 = vlaneseq
    %v684 = vshrl.u32 %v683, 7
    %686 = vset.pattern.permute.xlu0 %v684
    %687 = vperm.xlu0 %686, %v682
    %v688 = vpop.permute.xlu0 %687
    %v689 = vlaneseq
    %v690 = vshrl.u32 %v689, 7
    %v691 = vadd.s32 %v690, 8
    %692 = vset.pattern.permute.xlu0 %v691
    %693 = vperm.xlu0 %692, %v682
    %v694 = vpop.permute.xlu0 %693
    %v695 = vlaneseq
    %v696 = vshrl.u32 %v695, 7
    %v697 = vadd.s32 %v696, 16
    %698 = vset.pattern.permute.xlu0 %v697
    %699 = vperm.xlu0 %698, %v682
    %v700 = vpop.permute.xlu0 %699
    %v701 = vlaneseq
    %v702 = vshrl.u32 %v701, 7
    %v703 = vadd.s32 %v702, 24
    %704 = vset.pattern.permute.xlu0 %v703
    %705 = vperm.xlu0 %704, %v682
    %v706 = vpop.permute.xlu0 %705
    %v707 = vlaneseq
    %v708 = vshrl.u32 %v707, 7
    %v709 = vadd.s32 %v708, 32
    %710 = vset.pattern.permute.xlu0 %v709
    %711 = vperm.xlu0 %710, %v682
    %v712 = vpop.permute.xlu0 %711
    %v713 = vlaneseq
    %v714 = vshrl.u32 %v713, 7
    %v715 = vadd.s32 %v714, 40
    %716 = vset.pattern.permute.xlu0 %v715
    %717 = vperm.xlu0 %716, %v682
    %v718 = vpop.permute.xlu0 %717
    %v731 = vmul.f32 %v123, %v651
    %v732 = vmul.f32 %v125, %v657
    %v733 = vmul.f32 %v127, %v663
    %v734 = vmul.f32 %v129, %v669
    %v735 = vmul.f32 %v131, %v675
    %v736 = vmul.f32 %v133, %v681
    %v737 = vmul.f32 %v135, %v688
    %v738 = vmul.f32 %v137, %v694
    %v739 = vmul.f32 %v139, %v700
    %v740 = vmul.f32 %v141, %v706
    %v741 = vmul.f32 %v143, %v712
    %v742 = vmul.f32 %v145, %v718
    %755 = vset.pattern.permute.xlu0 0
    %756 = vperm.xlu0 %755, %v731
    %v757 = vpop.permute.xlu0 %756
    %758 = vset.pattern.permute.xlu0 0
    %759 = vperm.xlu0 %758, %v732
    %v760 = vpop.permute.xlu0 %759
    %761 = vset.pattern.permute.xlu0 0
    %762 = vperm.xlu0 %761, %v733
    %v763 = vpop.permute.xlu0 %762
    %764 = vset.pattern.permute.xlu0 0
    %765 = vperm.xlu0 %764, %v734
    %v766 = vpop.permute.xlu0 %765
    %767 = vset.pattern.permute.xlu0 0
    %768 = vperm.xlu0 %767, %v735
    %v769 = vpop.permute.xlu0 %768
    %770 = vset.pattern.permute.xlu0 0
    %771 = vperm.xlu0 %770, %v736
    %v772 = vpop.permute.xlu0 %771
    %773 = vset.pattern.permute.xlu0 0
    %774 = vperm.xlu0 %773, %v737
    %v775 = vpop.permute.xlu0 %774
    %776 = vset.pattern.permute.xlu0 0
    %777 = vperm.xlu0 %776, %v738
    %v778 = vpop.permute.xlu0 %777
    %779 = vset.pattern.permute.xlu0 0
    %780 = vperm.xlu0 %779, %v739
    %v781 = vpop.permute.xlu0 %780
    %782 = vset.pattern.permute.xlu0 0
    %783 = vperm.xlu0 %782, %v740
    %v784 = vpop.permute.xlu0 %783
    %785 = vset.pattern.permute.xlu0 0
    %786 = vperm.xlu0 %785, %v741
    %v787 = vpop.permute.xlu0 %786
    %788 = vset.pattern.permute.xlu0 0
    %789 = vperm.xlu0 %788, %v742
    %v790 = vpop.permute.xlu0 %789
    %v791 = vperm.slane %v757, %v596
    %v792 = vperm.slane %v760, %v598
    %v793 = vsel %vm600, %v792, %v791
    %v794 = vperm.slane %v763, %v602
    %v795 = vsel %vm604, %v794, %v793
    %v796 = vperm.slane %v766, %v606
    %v797 = vsel %vm608, %v796, %v795
    %v798 = vperm.slane %v769, %v610
    %v799 = vsel %vm612, %v798, %v797
    %v800 = vperm.slane %v772, %v614
    %v801 = vsel %vm616, %v800, %v799
    %v802 = vperm.slane %v775, %v596
    %v803 = vperm.slane %v778, %v598
    %v804 = vsel %vm600, %v803, %v802
    %v805 = vperm.slane %v781, %v602
    %v806 = vsel %vm604, %v805, %v804
    %v807 = vperm.slane %v784, %v606
    %v808 = vsel %vm608, %v807, %v806
    %v809 = vperm.slane %v787, %v610
    %v810 = vsel %vm612, %v809, %v808
    %v811 = vperm.slane %v790, %v614
    %v812 = vsel %vm616, %v811, %v810
    %v813 = vsel %vm629, %v812, %v801
    %v815 = vsel %vm421, %v813, 0.0
    %816 = vadd.xlane.f32.xlu0 %v815
    %v817 = vpop.xlane.xlu0 %816
    %v818 = vrot.slane %v817, 4
    %v819 = vadd.f32 %v817, %v818
    %v820 = vrot.slane %v819, 2
    %v821 = vadd.f32 %v819, %v820
    %v822 = vrot.slane %v821, 1
    %v823 = vadd.f32 %v821, %v822
    %s824 = vtos %v823
    %v825 = vstv %s824
    %v826 = vld [vmem:[%s3] sm:$0xff]
    %v827 = vld [vmem:[%s3 + $0x8] sm:$0xff]
    %v828 = vld [vmem:[%s3 + $0x10] sm:$0xff]
    %v829 = vld [vmem:[%s3 + $0x18] sm:$0xff]
    %v830 = vld [vmem:[%s3 + $0x20] sm:$0xff]
    %v831 = vld [vmem:[%s3 + $0x28] sm:$0xff]
    %v832 = vld [vmem:[%s4] sm:$0xff]
    %v833 = vld [vmem:[%s4 + $0x8] sm:$0xff]
    %v834 = vld [vmem:[%s4 + $0x10] sm:$0xff]
    %v835 = vld [vmem:[%s4 + $0x18] sm:$0xff]
    %v836 = vld [vmem:[%s4 + $0x20] sm:$0xff]
    %v837 = vld [vmem:[%s4 + $0x28] sm:$0xff]
    %v838 = vld [vmem:[%s5] sm:$0x1]
    %839 = vmax.xlane.f32.xlu0 %v826
    %v840 = vpop.xlane.xlu0 %839
    %841 = vmax.xlane.f32.xlu0 %v827
    %v842 = vpop.xlane.xlu0 %841
    %843 = vmax.xlane.f32.xlu0 %v828
    %v844 = vpop.xlane.xlu0 %843
    %845 = vmax.xlane.f32.xlu0 %v829
    %v846 = vpop.xlane.xlu0 %845
    %847 = vmax.xlane.f32.xlu0 %v830
    %v848 = vpop.xlane.xlu0 %847
    %849 = vmax.xlane.f32.xlu0 %v831
    %v850 = vpop.xlane.xlu0 %849
    %v851 = vsub.f32 %v826, %v840
    %v852 = vsub.f32 %v827, %v842
    %v853 = vsub.f32 %v828, %v844
    %v854 = vsub.f32 %v829, %v846
    %v855 = vsub.f32 %v830, %v848
    %v856 = vsub.f32 %v831, %v850
    %v857 = vmul.f32 %v851, 1.442695
    %v858 = vpow.pop %v857
    %v859 = vmul.f32 %v852, 1.442695
    %v860 = vpow.pop %v859
    %v861 = vmul.f32 %v853, 1.442695
    %v862 = vpow.pop %v861
    %v863 = vmul.f32 %v854, 1.442695
    %v864 = vpow.pop %v863
    %v865 = vmul.f32 %v855, 1.442695
    %v866 = vpow.pop %v865
    %v867 = vmul.f32 %v856, 1.442695
    %v868 = vpow.pop %v867
    %869 = vadd.xlane.f32.xlu0 %v858
    %v870 = vpop.xlane.xlu0 %869
    %871 = vadd.xlane.f32.xlu0 %v860
    %v872 = vpop.xlane.xlu0 %871
    %873 = vadd.xlane.f32.xlu0 %v862
    %v874 = vpop.xlane.xlu0 %873
    %875 = vadd.xlane.f32.xlu0 %v864
    %v876 = vpop.xlane.xlu0 %875
    %877 = vadd.xlane.f32.xlu0 %v866
    %v878 = vpop.xlane.xlu0 %877
    %879 = vadd.xlane.f32.xlu0 %v868
    %v880 = vpop.xlane.xlu0 %879
    %v881 = vlog2.pop %v870
    %v882 = vmul.f32 %v881, 0.6931472
    %v883 = vlog2.pop %v872
    %v884 = vmul.f32 %v883, 0.6931472
    %v885 = vlog2.pop %v874
    %v886 = vmul.f32 %v885, 0.6931472
    %v887 = vlog2.pop %v876
    %v888 = vmul.f32 %v887, 0.6931472
    %v889 = vlog2.pop %v878
    %v890 = vmul.f32 %v889, 0.6931472
    %v891 = vlog2.pop %v880
    %v892 = vmul.f32 %v891, 0.6931472
    %v893 = vsub.f32 %v851, %v882
    %v894 = vsub.f32 %v852, %v884
    %v895 = vsub.f32 %v853, %v886
    %v896 = vsub.f32 %v854, %v888
    %v897 = vsub.f32 %v855, %v890
    %v898 = vsub.f32 %v856, %v892
    %v899 = vrcp.pop %v870
    %v900 = vrcp.pop %v872
    %v901 = vrcp.pop %v874
    %v902 = vrcp.pop %v876
    %v903 = vrcp.pop %v878
    %v904 = vrcp.pop %v880
    %v905 = vmul.f32 %v858, %v899
    %v906 = vmul.f32 %v860, %v900
    %v907 = vmul.f32 %v862, %v901
    %v908 = vmul.f32 %v864, %v902
    %v909 = vmul.f32 %v866, %v903
    %v910 = vmul.f32 %v868, %v904
    %911 = vst [vmem:[#allocation9] sm:$0xff] %v905
    %912 = vst [vmem:[#allocation9 + $0x8] sm:$0xff] %v906
    %913 = vst [vmem:[#allocation9 + $0x10] sm:$0xff] %v907
    %914 = vst [vmem:[#allocation9 + $0x18] sm:$0xff] %v908
    %915 = vst [vmem:[#allocation9 + $0x20] sm:$0xff] %v909
    %916 = vst [vmem:[#allocation9 + $0x28] sm:$0xff] %v910
    %917 = vset.pattern.permute.xlu0 0
    %918 = vperm.xlu0 %917, %v832
    %v919 = vpop.permute.xlu0 %918
    %920 = vset.pattern.permute.xlu0 0
    %921 = vperm.xlu0 %920, %v833
    %v922 = vpop.permute.xlu0 %921
    %923 = vset.pattern.permute.xlu0 0
    %924 = vperm.xlu0 %923, %v834
    %v925 = vpop.permute.xlu0 %924
    %926 = vset.pattern.permute.xlu0 0
    %927 = vperm.xlu0 %926, %v835
    %v928 = vpop.permute.xlu0 %927
    %929 = vset.pattern.permute.xlu0 0
    %930 = vperm.xlu0 %929, %v836
    %v931 = vpop.permute.xlu0 %930
    %932 = vset.pattern.permute.xlu0 0
    %933 = vperm.xlu0 %932, %v837
    %v934 = vpop.permute.xlu0 %933
    %vm935 = vcmp.eq.s32.totalorder %v596, %v919
    %vm936 = vcmp.eq.s32.totalorder %v596, %v922
    %vm937 = vcmp.eq.s32.totalorder %v596, %v925
    %vm938 = vcmp.eq.s32.totalorder %v596, %v928
    %vm939 = vcmp.eq.s32.totalorder %v596, %v931
    %vm940 = vcmp.eq.s32.totalorder %v596, %v934
    %v941 = vsel %vm935, 1, 0
    %v942 = vsel %vm936, 1, 0
    %v943 = vsel %vm937, 1, 0
    %v944 = vsel %vm938, 1, 0
    %v945 = vsel %vm939, 1, 0
    %v946 = vsel %vm940, 1, 0
    %v947 = vcvt.s32.f32 %v941
    %v948 = vcvt.s32.f32 %v942
    %v949 = vcvt.s32.f32 %v943
    %v950 = vcvt.s32.f32 %v944
    %v951 = vcvt.s32.f32 %v945
    %v952 = vcvt.s32.f32 %v946
    %vm953 = vcmp.ne.s32.totalorder %v832, 4294967295
    %vm954 = vcmp.ne.s32.totalorder %v833, 4294967295
    %vm955 = vcmp.ne.s32.totalorder %v834, 4294967295
    %vm956 = vcmp.ne.s32.totalorder %v835, 4294967295
    %vm957 = vcmp.ne.s32.totalorder %v836, 4294967295
    %vm958 = vcmp.ne.s32.totalorder %v837, 4294967295
    %v959 = vsel %vm953, 1, 0
    %v960 = vsel %vm954, 1, 0
    %v961 = vsel %vm955, 1, 0
    %v962 = vsel %vm956, 1, 0
    %v963 = vsel %vm957, 1, 0
    %v964 = vsel %vm958, 1, 0
    %v965 = vcvt.s32.f32 %v959
    %v966 = vcvt.s32.f32 %v960
    %v967 = vcvt.s32.f32 %v961
    %v968 = vcvt.s32.f32 %v962
    %v969 = vcvt.s32.f32 %v963
    %v970 = vcvt.s32.f32 %v964
    %v971 = vmul.f32 %v947, 0.9
    %v972 = vmul.f32 %v948, 0.9
    %v973 = vmul.f32 %v949, 0.9
    %v974 = vmul.f32 %v950, 0.9
    %v975 = vmul.f32 %v951, 0.9
    %v976 = vmul.f32 %v952, 0.9
    %v977 = vadd.f32 %v971, 0.0125
    %v978 = vadd.f32 %v972, 0.0125
    %v979 = vadd.f32 %v973, 0.0125
    %v980 = vadd.f32 %v974, 0.0125
    %v981 = vadd.f32 %v975, 0.0125
    %v982 = vadd.f32 %v976, 0.0125
    %v984 = vperm.slane %v838, 0
    %v986 = vmul.f32 %v984, %v977
    %v987 = vmul.f32 %v984, %v978
    %v988 = vmul.f32 %v984, %v979
    %v989 = vmul.f32 %v984, %v980
    %v990 = vmul.f32 %v984, %v981
    %v991 = vmul.f32 %v984, %v982
    %v992 = vmul.f32 %v986, %v893
    %v993 = vmul.f32 %v987, %v894
    %v994 = vmul.f32 %v988, %v895
    %v995 = vmul.f32 %v989, %v896
    %v996 = vmul.f32 %v990, %v897
    %v997 = vmul.f32 %v991, %v898
    %998 = vadd.xlane.f32.xlu0 %v992
    %v999 = vpop.xlane.xlu0 %998
    %1000 = vadd.xlane.f32.xlu0 %v993
    %v1001 = vpop.xlane.xlu0 %1000
    %1002 = vadd.xlane.f32.xlu0 %v994
    %v1003 = vpop.xlane.xlu0 %1002
    %1004 = vadd.xlane.f32.xlu0 %v995
    %v1005 = vpop.xlane.xlu0 %1004
    %1006 = vadd.xlane.f32.xlu0 %v996
    %v1007 = vpop.xlane.xlu0 %1006
    %1008 = vadd.xlane.f32.xlu0 %v997
    %v1009 = vpop.xlane.xlu0 %1008
    %v1010 = vsub.f32 0.0, %v999
    %v1011 = vsub.f32 0.0, %v1001
    %v1012 = vsub.f32 0.0, %v1003
    %v1013 = vsub.f32 0.0, %v1005
    %v1014 = vsub.f32 0.0, %v1007
    %v1015 = vsub.f32 0.0, %v1009
    %v1016 = vmul.f32 %v1010, %v965
    %v1017 = vmul.f32 %v1011, %v966
    %v1018 = vmul.f32 %v1012, %v967
    %v1019 = vmul.f32 %v1013, %v968
    %v1020 = vmul.f32 %v1014, %v969
    %v1021 = vmul.f32 %v1015, %v970
    %vm1022 = vcmask 7168
    %v1023 = vsel %vm1022, %v1016, 0.0
    %v1024 = vsel %vm1022, %v1017, 0.0
    %v1025 = vadd.f32 %v1023, %v1024
    %v1026 = vsel %vm1022, %v1018, 0.0
    %v1027 = vadd.f32 %v1025, %v1026
    %v1028 = vsel %vm1022, %v1019, 0.0
    %v1029 = vadd.f32 %v1027, %v1028
    %v1030 = vsel %vm1022, %v1020, 0.0
    %v1031 = vadd.f32 %v1029, %v1030
    %v1032 = vsel %vm1022, %v1021, 0.0
    %v1033 = vadd.f32 %v1031, %v1032
    %1034 = vadd.xlane.f32.xlu0 %v1033
    %v1035 = vpop.xlane.xlu0 %1034
    %v1036 = vrot.slane %v1035, 4
    %v1037 = vadd.f32 %v1035, %v1036
    %v1038 = vrot.slane %v1037, 2
    %v1039 = vadd.f32 %v1037, %v1038
    %v1040 = vrot.slane %v1039, 1
    %v1041 = vadd.f32 %v1039, %v1040
    %s1042 = vtos %v1041
    %v1043 = vstv %s1042
    %v1044 = vadd.f32 %v1043, %v825
    %v1045 = vmul.f32 %v1044, %v447
    %v1046 = vmul.f32 %v1045, 0.5
    %v1047 = vadd.f32 %v643, %v1046
    %v1049 = vperm.slane %v258, 0
    %v1050 = vlaneseq
    %v1051 = vshrl.u32 %v1050, 7
    %1053 = vset.pattern.permute.xlu0 %v1051
    %1054 = vperm.xlu0 %1053, %v1049
    %v1055 = vpop.permute.xlu0 %1054
    %v1056 = vlaneseq
    %v1057 = vshrl.u32 %v1056, 7
    %v1058 = vadd.s32 %v1057, 8
    %1059 = vset.pattern.permute.xlu0 %v1058
    %1060 = vperm.xlu0 %1059, %v1049
    %v1061 = vpop.permute.xlu0 %1060
    %v1062 = vlaneseq
    %v1063 = vshrl.u32 %v1062, 7
    %v1064 = vadd.s32 %v1063, 16
    %1065 = vset.pattern.permute.xlu0 %v1064
    %1066 = vperm.xlu0 %1065, %v1049
    %v1067 = vpop.permute.xlu0 %1066
    %v1068 = vlaneseq
    %v1069 = vshrl.u32 %v1068, 7
    %v1070 = vadd.s32 %v1069, 24
    %1071 = vset.pattern.permute.xlu0 %v1070
    %1072 = vperm.xlu0 %1071, %v1049
    %v1073 = vpop.permute.xlu0 %1072
    %v1074 = vlaneseq
    %v1075 = vshrl.u32 %v1074, 7
    %v1076 = vadd.s32 %v1075, 32
    %1077 = vset.pattern.permute.xlu0 %v1076
    %1078 = vperm.xlu0 %1077, %v1049
    %v1079 = vpop.permute.xlu0 %1078
    %v1080 = vlaneseq
    %v1081 = vshrl.u32 %v1080, 7
    %v1082 = vadd.s32 %v1081, 40
    %1083 = vset.pattern.permute.xlu0 %v1082
    %1084 = vperm.xlu0 %1083, %v1049
    %v1085 = vpop.permute.xlu0 %1084
    %v1086 = vperm.slane %v258, 1
    %v1087 = vlaneseq
    %v1088 = vshrl.u32 %v1087, 7
    %1090 = vset.pattern.permute.xlu0 %v1088
    %1091 = vperm.xlu0 %1090, %v1086
    %v1092 = vpop.permute.xlu0 %1091
    %v1093 = vlaneseq
    %v1094 = vshrl.u32 %v1093, 7
    %v1095 = vadd.s32 %v1094, 8
    %1096 = vset.pattern.permute.xlu0 %v1095
    %1097 = vperm.xlu0 %1096, %v1086
    %v1098 = vpop.permute.xlu0 %1097
    %v1099 = vlaneseq
    %v1100 = vshrl.u32 %v1099, 7
    %v1101 = vadd.s32 %v1100, 16
    %1102 = vset.pattern.permute.xlu0 %v1101
    %1103 = vperm.xlu0 %1102, %v1086
    %v1104 = vpop.permute.xlu0 %1103
    %v1105 = vlaneseq
    %v1106 = vshrl.u32 %v1105, 7
    %v1107 = vadd.s32 %v1106, 24
    %1108 = vset.pattern.permute.xlu0 %v1107
    %1109 = vperm.xlu0 %1108, %v1086
    %v1110 = vpop.permute.xlu0 %1109
    %v1111 = vlaneseq
    %v1112 = vshrl.u32 %v1111, 7
    %v1113 = vadd.s32 %v1112, 32
    %1114 = vset.pattern.permute.xlu0 %v1113
    %1115 = vperm.xlu0 %1114, %v1086
    %v1116 = vpop.permute.xlu0 %1115
    %v1117 = vlaneseq
    %v1118 = vshrl.u32 %v1117, 7
    %v1119 = vadd.s32 %v1118, 40
    %1120 = vset.pattern.permute.xlu0 %v1119
    %1121 = vperm.xlu0 %1120, %v1086
    %v1122 = vpop.permute.xlu0 %1121
    %v1135 = vmul.f32 %v409, %v1055
    %v1136 = vmul.f32 %v410, %v1061
    %v1137 = vmul.f32 %v411, %v1067
    %v1138 = vmul.f32 %v412, %v1073
    %v1139 = vmul.f32 %v413, %v1079
    %v1140 = vmul.f32 %v414, %v1085
    %v1141 = vmul.f32 %v415, %v1092
    %v1142 = vmul.f32 %v416, %v1098
    %v1143 = vmul.f32 %v417, %v1104
    %v1144 = vmul.f32 %v418, %v1110
    %v1145 = vmul.f32 %v419, %v1116
    %v1146 = vmul.f32 %v420, %v1122
    %1159 = vset.pattern.permute.xlu0 0
    %1160 = vperm.xlu0 %1159, %v1135
    %v1161 = vpop.permute.xlu0 %1160
    %1162 = vset.pattern.permute.xlu0 0
    %1163 = vperm.xlu0 %1162, %v1136
    %v1164 = vpop.permute.xlu0 %1163
    %1165 = vset.pattern.permute.xlu0 0
    %1166 = vperm.xlu0 %1165, %v1137
    %v1167 = vpop.permute.xlu0 %1166
    %1168 = vset.pattern.permute.xlu0 0
    %1169 = vperm.xlu0 %1168, %v1138
    %v1170 = vpop.permute.xlu0 %1169
    %1171 = vset.pattern.permute.xlu0 0
    %1172 = vperm.xlu0 %1171, %v1139
    %v1173 = vpop.permute.xlu0 %1172
    %1174 = vset.pattern.permute.xlu0 0
    %1175 = vperm.xlu0 %1174, %v1140
    %v1176 = vpop.permute.xlu0 %1175
    %1177 = vset.pattern.permute.xlu0 0
    %1178 = vperm.xlu0 %1177, %v1141
    %v1179 = vpop.permute.xlu0 %1178
    %1180 = vset.pattern.permute.xlu0 0
    %1181 = vperm.xlu0 %1180, %v1142
    %v1182 = vpop.permute.xlu0 %1181
    %1183 = vset.pattern.permute.xlu0 0
    %1184 = vperm.xlu0 %1183, %v1143
    %v1185 = vpop.permute.xlu0 %1184
    %1186 = vset.pattern.permute.xlu0 0
    %1187 = vperm.xlu0 %1186, %v1144
    %v1188 = vpop.permute.xlu0 %1187
    %1189 = vset.pattern.permute.xlu0 0
    %1190 = vperm.xlu0 %1189, %v1145
    %v1191 = vpop.permute.xlu0 %1190
    %1192 = vset.pattern.permute.xlu0 0
    %1193 = vperm.xlu0 %1192, %v1146
    %v1194 = vpop.permute.xlu0 %1193
    %v1195 = vperm.slane %v1161, %v596
    %v1196 = vperm.slane %v1164, %v598
    %v1197 = vsel %vm600, %v1196, %v1195
    %v1198 = vperm.slane %v1167, %v602
    %v1199 = vsel %vm604, %v1198, %v1197
    %v1200 = vperm.slane %v1170, %v606
    %v1201 = vsel %vm608, %v1200, %v1199
    %v1202 = vperm.slane %v1173, %v610
    %v1203 = vsel %vm612, %v1202, %v1201
    %v1204 = vperm.slane %v1176, %v614
    %v1205 = vsel %vm616, %v1204, %v1203
    %v1206 = vperm.slane %v1179, %v596
    %v1207 = vperm.slane %v1182, %v598
    %v1208 = vsel %vm600, %v1207, %v1206
    %v1209 = vperm.slane %v1185, %v602
    %v1210 = vsel %vm604, %v1209, %v1208
    %v1211 = vperm.slane %v1188, %v606
    %v1212 = vsel %vm608, %v1211, %v1210
    %v1213 = vperm.slane %v1191, %v610
    %v1214 = vsel %vm612, %v1213, %v1212
    %v1215 = vperm.slane %v1194, %v614
    %v1216 = vsel %vm616, %v1215, %v1214
    %v1217 = vsel %vm629, %v1216, %v1205
    %v1219 = vsel %vm421, %v1217, 0.0
    %1220 = vadd.xlane.f32.xlu0 %v1219
    %v1221 = vpop.xlane.xlu0 %1220
    %v1222 = vrot.slane %v1221, 4
    %v1223 = vadd.f32 %v1221, %v1222
    %v1224 = vrot.slane %v1223, 2
    %v1225 = vadd.f32 %v1223, %v1224
    %v1226 = vrot.slane %v1225, 1
    %v1227 = vadd.f32 %v1225, %v1226
    %s1228 = vtos %v1227
    %v1229 = vstv %s1228
    %v1231 = vperm.slane %v260, 0
    %v1232 = vlaneseq
    %v1233 = vshrl.u32 %v1232, 7
    %1235 = vset.pattern.permute.xlu0 %v1233
    %1236 = vperm.xlu0 %1235, %v1231
    %v1237 = vpop.permute.xlu0 %1236
    %v1238 = vlaneseq
    %v1239 = vshrl.u32 %v1238, 7
    %v1240 = vadd.s32 %v1239, 8
    %1241 = vset.pattern.permute.xlu0 %v1240
    %1242 = vperm.xlu0 %1241, %v1231
    %v1243 = vpop.permute.xlu0 %1242
    %v1244 = vlaneseq
    %v1245 = vshrl.u32 %v1244, 7
    %v1246 = vadd.s32 %v1245, 16
    %1247 = vset.pattern.permute.xlu0 %v1246
    %1248 = vperm.xlu0 %1247, %v1231
    %v1249 = vpop.permute.xlu0 %1248
    %v1250 = vlaneseq
    %v1251 = vshrl.u32 %v1250, 7
    %v1252 = vadd.s32 %v1251, 24
    %1253 = vset.pattern.permute.xlu0 %v1252
    %1254 = vperm.xlu0 %1253, %v1231
    %v1255 = vpop.permute.xlu0 %1254
    %v1256 = vlaneseq
    %v1257 = vshrl.u32 %v1256, 7
    %v1258 = vadd.s32 %v1257, 32
    %1259 = vset.pattern.permute.xlu0 %v1258
    %1260 = vperm.xlu0 %1259, %v1231
    %v1261 = vpop.permute.xlu0 %1260
    %v1262 = vlaneseq
    %v1263 = vshrl.u32 %v1262, 7
    %v1264 = vadd.s32 %v1263, 40
    %1265 = vset.pattern.permute.xlu0 %v1264
    %1266 = vperm.xlu0 %1265, %v1231
    %v1267 = vpop.permute.xlu0 %1266
    %v1268 = vperm.slane %v260, 1
    %v1269 = vlaneseq
    %v1270 = vshrl.u32 %v1269, 7
    %1272 = vset.pattern.permute.xlu0 %v1270
    %1273 = vperm.xlu0 %1272, %v1268
    %v1274 = vpop.permute.xlu0 %1273
    %v1275 = vlaneseq
    %v1276 = vshrl.u32 %v1275, 7
    %v1277 = vadd.s32 %v1276, 8
    %1278 = vset.pattern.permute.xlu0 %v1277
    %1279 = vperm.xlu0 %1278, %v1268
    %v1280 = vpop.permute.xlu0 %1279
    %v1281 = vlaneseq
    %v1282 = vshrl.u32 %v1281, 7
    %v1283 = vadd.s32 %v1282, 16
    %1284 = vset.pattern.permute.xlu0 %v1283
    %1285 = vperm.xlu0 %1284, %v1268
    %v1286 = vpop.permute.xlu0 %1285
    %v1287 = vlaneseq
    %v1288 = vshrl.u32 %v1287, 7
    %v1289 = vadd.s32 %v1288, 24
    %1290 = vset.pattern.permute.xlu0 %v1289
    %1291 = vperm.xlu0 %1290, %v1268
    %v1292 = vpop.permute.xlu0 %1291
    %v1293 = vlaneseq
    %v1294 = vshrl.u32 %v1293, 7
    %v1295 = vadd.s32 %v1294, 32
    %1296 = vset.pattern.permute.xlu0 %v1295
    %1297 = vperm.xlu0 %1296, %v1268
    %v1298 = vpop.permute.xlu0 %1297
    %v1299 = vlaneseq
    %v1300 = vshrl.u32 %v1299, 7
    %v1301 = vadd.s32 %v1300, 40
    %1302 = vset.pattern.permute.xlu0 %v1301
    %1303 = vperm.xlu0 %1302, %v1268
    %v1304 = vpop.permute.xlu0 %1303
    %v1317 = vmul.f32 %v409, %v1237
    %v1318 = vmul.f32 %v410, %v1243
    %v1319 = vmul.f32 %v411, %v1249
    %v1320 = vmul.f32 %v412, %v1255
    %v1321 = vmul.f32 %v413, %v1261
    %v1322 = vmul.f32 %v414, %v1267
    %v1323 = vmul.f32 %v415, %v1274
    %v1324 = vmul.f32 %v416, %v1280
    %v1325 = vmul.f32 %v417, %v1286
    %v1326 = vmul.f32 %v418, %v1292
    %v1327 = vmul.f32 %v419, %v1298
    %v1328 = vmul.f32 %v420, %v1304
    %1341 = vset.pattern.permute.xlu0 0
    %1342 = vperm.xlu0 %1341, %v1317
    %v1343 = vpop.permute.xlu0 %1342
    %1344 = vset.pattern.permute.xlu0 0
    %1345 = vperm.xlu0 %1344, %v1318
    %v1346 = vpop.permute.xlu0 %1345
    %1347 = vset.pattern.permute.xlu0 0
    %1348 = vperm.xlu0 %1347, %v1319
    %v1349 = vpop.permute.xlu0 %1348
    %1350 = vset.pattern.permute.xlu0 0
    %1351 = vperm.xlu0 %1350, %v1320
    %v1352 = vpop.permute.xlu0 %1351
    %1353 = vset.pattern.permute.xlu0 0
    %1354 = vperm.xlu0 %1353, %v1321
    %v1355 = vpop.permute.xlu0 %1354
    %1356 = vset.pattern.permute.xlu0 0
    %1357 = vperm.xlu0 %1356, %v1322
    %v1358 = vpop.permute.xlu0 %1357
    %1359 = vset.pattern.permute.xlu0 0
    %1360 = vperm.xlu0 %1359, %v1323
    %v1361 = vpop.permute.xlu0 %1360
    %1362 = vset.pattern.permute.xlu0 0
    %1363 = vperm.xlu0 %1362, %v1324
    %v1364 = vpop.permute.xlu0 %1363
    %1365 = vset.pattern.permute.xlu0 0
    %1366 = vperm.xlu0 %1365, %v1325
    %v1367 = vpop.permute.xlu0 %1366
    %1368 = vset.pattern.permute.xlu0 0
    %1369 = vperm.xlu0 %1368, %v1326
    %v1370 = vpop.permute.xlu0 %1369
    %1371 = vset.pattern.permute.xlu0 0
    %1372 = vperm.xlu0 %1371, %v1327
    %v1373 = vpop.permute.xlu0 %1372
    %1374 = vset.pattern.permute.xlu0 0
    %1375 = vperm.xlu0 %1374, %v1328
    %v1376 = vpop.permute.xlu0 %1375
    %v1377 = vperm.slane %v1343, %v596
    %v1378 = vperm.slane %v1346, %v598
    %v1379 = vsel %vm600, %v1378, %v1377
    %v1380 = vperm.slane %v1349, %v602
    %v1381 = vsel %vm604, %v1380, %v1379
    %v1382 = vperm.slane %v1352, %v606
    %v1383 = vsel %vm608, %v1382, %v1381
    %v1384 = vperm.slane %v1355, %v610
    %v1385 = vsel %vm612, %v1384, %v1383
    %v1386 = vperm.slane %v1358, %v614
    %v1387 = vsel %vm616, %v1386, %v1385
    %v1388 = vperm.slane %v1361, %v596
    %v1389 = vperm.slane %v1364, %v598
    %v1390 = vsel %vm600, %v1389, %v1388
    %v1391 = vperm.slane %v1367, %v602
    %v1392 = vsel %vm604, %v1391, %v1390
    %v1393 = vperm.slane %v1370, %v606
    %v1394 = vsel %vm608, %v1393, %v1392
    %v1395 = vperm.slane %v1373, %v610
    %v1396 = vsel %vm612, %v1395, %v1394
    %v1397 = vperm.slane %v1376, %v614
    %v1398 = vsel %vm616, %v1397, %v1396
    %v1399 = vsel %vm629, %v1398, %v1387
    %v1401 = vsel %vm421, %v1399, 0.0
    %1402 = vadd.xlane.f32.xlu0 %v1401
    %v1403 = vpop.xlane.xlu0 %1402
    %v1404 = vrot.slane %v1403, 4
    %v1405 = vadd.f32 %v1403, %v1404
    %v1406 = vrot.slane %v1405, 2
    %v1407 = vadd.f32 %v1405, %v1406
    %v1408 = vrot.slane %v1407, 1
    %v1409 = vadd.f32 %v1407, %v1408
    %s1410 = vtos %v1409
    %v1411 = vstv %s1410
    %v1413 = vperm.slane %v262, 0
    %v1414 = vlaneseq
    %v1415 = vshrl.u32 %v1414, 7
    %1417 = vset.pattern.permute.xlu0 %v1415
    %1418 = vperm.xlu0 %1417, %v1413
    %v1419 = vpop.permute.xlu0 %1418
    %v1420 = vlaneseq
    %v1421 = vshrl.u32 %v1420, 7
    %v1422 = vadd.s32 %v1421, 8
    %1423 = vset.pattern.permute.xlu0 %v1422
    %1424 = vperm.xlu0 %1423, %v1413
    %v1425 = vpop.permute.xlu0 %1424
    %v1426 = vlaneseq
    %v1427 = vshrl.u32 %v1426, 7
    %v1428 = vadd.s32 %v1427, 16
    %1429 = vset.pattern.permute.xlu0 %v1428
    %1430 = vperm.xlu0 %1429, %v1413
    %v1431 = vpop.permute.xlu0 %1430
    %v1432 = vlaneseq
    %v1433 = vshrl.u32 %v1432, 7
    %v1434 = vadd.s32 %v1433, 24
    %1435 = vset.pattern.permute.xlu0 %v1434
    %1436 = vperm.xlu0 %1435, %v1413
    %v1437 = vpop.permute.xlu0 %1436
    %v1438 = vlaneseq
    %v1439 = vshrl.u32 %v1438, 7
    %v1440 = vadd.s32 %v1439, 32
    %1441 = vset.pattern.permute.xlu0 %v1440
    %1442 = vperm.xlu0 %1441, %v1413
    %v1443 = vpop.permute.xlu0 %1442
    %v1444 = vlaneseq
    %v1445 = vshrl.u32 %v1444, 7
    %v1446 = vadd.s32 %v1445, 40
    %1447 = vset.pattern.permute.xlu0 %v1446
    %1448 = vperm.xlu0 %1447, %v1413
    %v1449 = vpop.permute.xlu0 %1448
    %v1450 = vperm.slane %v262, 1
    %v1451 = vlaneseq
    %v1452 = vshrl.u32 %v1451, 7
    %1454 = vset.pattern.permute.xlu0 %v1452
    %1455 = vperm.xlu0 %1454, %v1450
    %v1456 = vpop.permute.xlu0 %1455
    %v1457 = vlaneseq
    %v1458 = vshrl.u32 %v1457, 7
    %v1459 = vadd.s32 %v1458, 8
    %1460 = vset.pattern.permute.xlu0 %v1459
    %1461 = vperm.xlu0 %1460, %v1450
    %v1462 = vpop.permute.xlu0 %1461
    %v1463 = vlaneseq
    %v1464 = vshrl.u32 %v1463, 7
    %v1465 = vadd.s32 %v1464, 16
    %1466 = vset.pattern.permute.xlu0 %v1465
    %1467 = vperm.xlu0 %1466, %v1450
    %v1468 = vpop.permute.xlu0 %1467
    %v1469 = vlaneseq
    %v1470 = vshrl.u32 %v1469, 7
    %v1471 = vadd.s32 %v1470, 24
    %1472 = vset.pattern.permute.xlu0 %v1471
    %1473 = vperm.xlu0 %1472, %v1450
    %v1474 = vpop.permute.xlu0 %1473
    %v1475 = vlaneseq
    %v1476 = vshrl.u32 %v1475, 7
    %v1477 = vadd.s32 %v1476, 32
    %1478 = vset.pattern.permute.xlu0 %v1477
    %1479 = vperm.xlu0 %1478, %v1450
    %v1480 = vpop.permute.xlu0 %1479
    %v1481 = vlaneseq
    %v1482 = vshrl.u32 %v1481, 7
    %v1483 = vadd.s32 %v1482, 40
    %1484 = vset.pattern.permute.xlu0 %v1483
    %1485 = vperm.xlu0 %1484, %v1450
    %v1486 = vpop.permute.xlu0 %1485
    %v1499 = vmul.f32 %v409, %v1419
    %v1500 = vmul.f32 %v410, %v1425
    %v1501 = vmul.f32 %v411, %v1431
    %v1502 = vmul.f32 %v412, %v1437
    %v1503 = vmul.f32 %v413, %v1443
    %v1504 = vmul.f32 %v414, %v1449
    %v1505 = vmul.f32 %v415, %v1456
    %v1506 = vmul.f32 %v416, %v1462
    %v1507 = vmul.f32 %v417, %v1468
    %v1508 = vmul.f32 %v418, %v1474
    %v1509 = vmul.f32 %v419, %v1480
    %v1510 = vmul.f32 %v420, %v1486
    %1523 = vset.pattern.permute.xlu0 0
    %1524 = vperm.xlu0 %1523, %v1499
    %v1525 = vpop.permute.xlu0 %1524
    %1526 = vset.pattern.permute.xlu0 0
    %1527 = vperm.xlu0 %1526, %v1500
    %v1528 = vpop.permute.xlu0 %1527
    %1529 = vset.pattern.permute.xlu0 0
    %1530 = vperm.xlu0 %1529, %v1501
    %v1531 = vpop.permute.xlu0 %1530
    %1532 = vset.pattern.permute.xlu0 0
    %1533 = vperm.xlu0 %1532, %v1502
    %v1534 = vpop.permute.xlu0 %1533
    %1535 = vset.pattern.permute.xlu0 0
    %1536 = vperm.xlu0 %1535, %v1503
    %v1537 = vpop.permute.xlu0 %1536
    %1538 = vset.pattern.permute.xlu0 0
    %1539 = vperm.xlu0 %1538, %v1504
    %v1540 = vpop.permute.xlu0 %1539
    %1541 = vset.pattern.permute.xlu0 0
    %1542 = vperm.xlu0 %1541, %v1505
    %v1543 = vpop.permute.xlu0 %1542
    %1544 = vset.pattern.permute.xlu0 0
    %1545 = vperm.xlu0 %1544, %v1506
    %v1546 = vpop.permute.xlu0 %1545
    %1547 = vset.pattern.permute.xlu0 0
    %1548 = vperm.xlu0 %1547, %v1507
    %v1549 = vpop.permute.xlu0 %1548
    %1550 = vset.pattern.permute.xlu0 0
    %1551 = vperm.xlu0 %1550, %v1508
    %v1552 = vpop.permute.xlu0 %1551
    %1553 = vset.pattern.permute.xlu0 0
    %1554 = vperm.xlu0 %1553, %v1509
    %v1555 = vpop.permute.xlu0 %1554
    %1556 = vset.pattern.permute.xlu0 0
    %1557 = vperm.xlu0 %1556, %v1510
    %v1558 = vpop.permute.xlu0 %1557
    %v1559 = vperm.slane %v1525, %v596
    %v1560 = vperm.slane %v1528, %v598
    %v1561 = vsel %vm600, %v1560, %v1559
    %v1562 = vperm.slane %v1531, %v602
    %v1563 = vsel %vm604, %v1562, %v1561
    %v1564 = vperm.slane %v1534, %v606
    %v1565 = vsel %vm608, %v1564, %v1563
    %v1566 = vperm.slane %v1537, %v610
    %v1567 = vsel %vm612, %v1566, %v1565
    %v1568 = vperm.slane %v1540, %v614
    %v1569 = vsel %vm616, %v1568, %v1567
    %v1570 = vperm.slane %v1543, %v596
    %v1571 = vperm.slane %v1546, %v598
    %v1572 = vsel %vm600, %v1571, %v1570
    %v1573 = vperm.slane %v1549, %v602
    %v1574 = vsel %vm604, %v1573, %v1572
    %v1575 = vperm.slane %v1552, %v606
    %v1576 = vsel %vm608, %v1575, %v1574
    %v1577 = vperm.slane %v1555, %v610
    %v1578 = vsel %vm612, %v1577, %v1576
    %v1579 = vperm.slane %v1558, %v614
    %v1580 = vsel %vm616, %v1579, %v1578
    %v1581 = vsel %vm629, %v1580, %v1569
    %v1583 = vsel %vm421, %v1581, 0.0
    %1584 = vadd.xlane.f32.xlu0 %v1583
    %v1585 = vpop.xlane.xlu0 %1584
    %v1586 = vrot.slane %v1585, 4
    %v1587 = vadd.f32 %v1585, %v1586
    %v1588 = vrot.slane %v1587, 2
    %v1589 = vadd.f32 %v1587, %v1588
    %v1590 = vrot.slane %v1589, 1
    %v1591 = vadd.f32 %v1589, %v1590
    %s1592 = vtos %v1591
    %v1593 = vstv %s1592
    %v1595 = vperm.slane %v264, 0
    %v1596 = vlaneseq
    %v1597 = vshrl.u32 %v1596, 7
    %1599 = vset.pattern.permute.xlu0 %v1597
    %1600 = vperm.xlu0 %1599, %v1595
    %v1601 = vpop.permute.xlu0 %1600
    %v1602 = vlaneseq
    %v1603 = vshrl.u32 %v1602, 7
    %v1604 = vadd.s32 %v1603, 8
    %1605 = vset.pattern.permute.xlu0 %v1604
    %1606 = vperm.xlu0 %1605, %v1595
    %v1607 = vpop.permute.xlu0 %1606
    %v1608 = vlaneseq
    %v1609 = vshrl.u32 %v1608, 7
    %v1610 = vadd.s32 %v1609, 16
    %1611 = vset.pattern.permute.xlu0 %v1610
    %1612 = vperm.xlu0 %1611, %v1595
    %v1613 = vpop.permute.xlu0 %1612
    %v1614 = vlaneseq
    %v1615 = vshrl.u32 %v1614, 7
    %v1616 = vadd.s32 %v1615, 24
    %1617 = vset.pattern.permute.xlu0 %v1616
    %1618 = vperm.xlu0 %1617, %v1595
    %v1619 = vpop.permute.xlu0 %1618
    %v1620 = vlaneseq
    %v1621 = vshrl.u32 %v1620, 7
    %v1622 = vadd.s32 %v1621, 32
    %1623 = vset.pattern.permute.xlu0 %v1622
    %1624 = vperm.xlu0 %1623, %v1595
    %v1625 = vpop.permute.xlu0 %1624
    %v1626 = vlaneseq
    %v1627 = vshrl.u32 %v1626, 7
    %v1628 = vadd.s32 %v1627, 40
    %1629 = vset.pattern.permute.xlu0 %v1628
    %1630 = vperm.xlu0 %1629, %v1595
    %v1631 = vpop.permute.xlu0 %1630
    %v1632 = vperm.slane %v264, 1
    %v1633 = vlaneseq
    %v1634 = vshrl.u32 %v1633, 7
    %1636 = vset.pattern.permute.xlu0 %v1634
    %1637 = vperm.xlu0 %1636, %v1632
    %v1638 = vpop.permute.xlu0 %1637
    %v1639 = vlaneseq
    %v1640 = vshrl.u32 %v1639, 7
    %v1641 = vadd.s32 %v1640, 8
    %1642 = vset.pattern.permute.xlu0 %v1641
    %1643 = vperm.xlu0 %1642, %v1632
    %v1644 = vpop.permute.xlu0 %1643
    %v1645 = vlaneseq
    %v1646 = vshrl.u32 %v1645, 7
    %v1647 = vadd.s32 %v1646, 16
    %1648 = vset.pattern.permute.xlu0 %v1647
    %1649 = vperm.xlu0 %1648, %v1632
    %v1650 = vpop.permute.xlu0 %1649
    %v1651 = vlaneseq
    %v1652 = vshrl.u32 %v1651, 7
    %v1653 = vadd.s32 %v1652, 24
    %1654 = vset.pattern.permute.xlu0 %v1653
    %1655 = vperm.xlu0 %1654, %v1632
    %v1656 = vpop.permute.xlu0 %1655
    %v1657 = vlaneseq
    %v1658 = vshrl.u32 %v1657, 7
    %v1659 = vadd.s32 %v1658, 32
    %1660 = vset.pattern.permute.xlu0 %v1659
    %1661 = vperm.xlu0 %1660, %v1632
    %v1662 = vpop.permute.xlu0 %1661
    %v1663 = vlaneseq
    %v1664 = vshrl.u32 %v1663, 7
    %v1665 = vadd.s32 %v1664, 40
    %1666 = vset.pattern.permute.xlu0 %v1665
    %1667 = vperm.xlu0 %1666, %v1632
    %v1668 = vpop.permute.xlu0 %1667
    %v1681 = vmul.f32 %v409, %v1601
    %v1682 = vmul.f32 %v410, %v1607
    %v1683 = vmul.f32 %v411, %v1613
    %v1684 = vmul.f32 %v412, %v1619
    %v1685 = vmul.f32 %v413, %v1625
    %v1686 = vmul.f32 %v414, %v1631
    %v1687 = vmul.f32 %v415, %v1638
    %v1688 = vmul.f32 %v416, %v1644
    %v1689 = vmul.f32 %v417, %v1650
    %v1690 = vmul.f32 %v418, %v1656
    %v1691 = vmul.f32 %v419, %v1662
    %v1692 = vmul.f32 %v420, %v1668
    %1705 = vset.pattern.permute.xlu0 0
    %1706 = vperm.xlu0 %1705, %v1681
    %v1707 = vpop.permute.xlu0 %1706
    %1708 = vset.pattern.permute.xlu0 0
    %1709 = vperm.xlu0 %1708, %v1682
    %v1710 = vpop.permute.xlu0 %1709
    %1711 = vset.pattern.permute.xlu0 0
    %1712 = vperm.xlu0 %1711, %v1683
    %v1713 = vpop.permute.xlu0 %1712
    %1714 = vset.pattern.permute.xlu0 0
    %1715 = vperm.xlu0 %1714, %v1684
    %v1716 = vpop.permute.xlu0 %1715
    %1717 = vset.pattern.permute.xlu0 0
    %1718 = vperm.xlu0 %1717, %v1685
    %v1719 = vpop.permute.xlu0 %1718
    %1720 = vset.pattern.permute.xlu0 0
    %1721 = vperm.xlu0 %1720, %v1686
    %v1722 = vpop.permute.xlu0 %1721
    %1723 = vset.pattern.permute.xlu0 0
    %1724 = vperm.xlu0 %1723, %v1687
    %v1725 = vpop.permute.xlu0 %1724
    %1726 = vset.pattern.permute.xlu0 0
    %1727 = vperm.xlu0 %1726, %v1688
    %v1728 = vpop.permute.xlu0 %1727
    %1729 = vset.pattern.permute.xlu0 0
    %1730 = vperm.xlu0 %1729, %v1689
    %v1731 = vpop.permute.xlu0 %1730
    %1732 = vset.pattern.permute.xlu0 0
    %1733 = vperm.xlu0 %1732, %v1690
    %v1734 = vpop.permute.xlu0 %1733
    %1735 = vset.pattern.permute.xlu0 0
    %1736 = vperm.xlu0 %1735, %v1691
    %v1737 = vpop.permute.xlu0 %1736
    %1738 = vset.pattern.permute.xlu0 0
    %1739 = vperm.xlu0 %1738, %v1692
    %v1740 = vpop.permute.xlu0 %1739
    %v1741 = vperm.slane %v1707, %v596
    %v1742 = vperm.slane %v1710, %v598
    %v1743 = vsel %vm600, %v1742, %v1741
    %v1744 = vperm.slane %v1713, %v602
    %v1745 = vsel %vm604, %v1744, %v1743
    %v1746 = vperm.slane %v1716, %v606
    %v1747 = vsel %vm608, %v1746, %v1745
    %v1748 = vperm.slane %v1719, %v610
    %v1749 = vsel %vm612, %v1748, %v1747
    %v1750 = vperm.slane %v1722, %v614
    %v1751 = vsel %vm616, %v1750, %v1749
    %v1752 = vperm.slane %v1725, %v596
    %v1753 = vperm.slane %v1728, %v598
    %v1754 = vsel %vm600, %v1753, %v1752
    %v1755 = vperm.slane %v1731, %v602
    %v1756 = vsel %vm604, %v1755, %v1754
    %v1757 = vperm.slane %v1734, %v606
    %v1758 = vsel %vm608, %v1757, %v1756
    %v1759 = vperm.slane %v1737, %v610
    %v1760 = vsel %vm612, %v1759, %v1758
    %v1761 = vperm.slane %v1740, %v614
    %v1762 = vsel %vm616, %v1761, %v1760
    %v1763 = vsel %vm629, %v1762, %v1751
    %v1765 = vsel %vm421, %v1763, 0.0
    %1766 = vadd.xlane.f32.xlu0 %v1765
    %v1767 = vpop.xlane.xlu0 %1766
    %v1768 = vrot.slane %v1767, 4
    %v1769 = vadd.f32 %v1767, %v1768
    %v1770 = vrot.slane %v1769, 2
    %v1771 = vadd.f32 %v1769, %v1770
    %v1772 = vrot.slane %v1771, 1
    %v1773 = vadd.f32 %v1771, %v1772
    %s1774 = vtos %v1773
    %v1775 = vstv %s1774
    %v1776 = vadd.f32 %v1229, %v1411
    %v1777 = vadd.f32 %v1776, %v1593
    %v1778 = vadd.f32 %v1777, %v1775
    %v1779 = vmul.f32 %v447, 0.5
    %v1780 = vmul.f32 %v1778, %v1779
    %v1781 = vsel %vm421, %v258, 0.0
    %1782 = vadd.xlane.f32.xlu0 %v1781
    %v1783 = vpop.xlane.xlu0 %1782
    %v1784 = vrot.slane %v1783, 4
    %v1785 = vadd.f32 %v1783, %v1784
    %v1786 = vrot.slane %v1785, 2
    %v1787 = vadd.f32 %v1785, %v1786
    %v1788 = vrot.slane %v1787, 1
    %v1789 = vadd.f32 %v1787, %v1788
    %s1790 = vtos %v1789
    %v1791 = vstv %s1790
    %v1792 = vrcp.pop %v1791
    %v1793 = vmul.f32 %v1229, %v1792
    %v1794 = vsel %vm421, %v260, 0.0
    %1795 = vadd.xlane.f32.xlu0 %v1794
    %v1796 = vpop.xlane.xlu0 %1795
    %v1797 = vrot.slane %v1796, 4
    %v1798 = vadd.f32 %v1796, %v1797
    %v1799 = vrot.slane %v1798, 2
    %v1800 = vadd.f32 %v1798, %v1799
    %v1801 = vrot.slane %v1800, 1
    %v1802 = vadd.f32 %v1800, %v1801
    %s1803 = vtos %v1802
    %v1804 = vstv %s1803
    %v1805 = vrcp.pop %v1804
    %v1806 = vmul.f32 %v1411, %v1805
    %v1807 = vsel %vm421, %v262, 0.0
    %1808 = vadd.xlane.f32.xlu0 %v1807
    %v1809 = vpop.xlane.xlu0 %1808
    %v1810 = vrot.slane %v1809, 4
    %v1811 = vadd.f32 %v1809, %v1810
    %v1812 = vrot.slane %v1811, 2
    %v1813 = vadd.f32 %v1811, %v1812
    %v1814 = vrot.slane %v1813, 1
    %v1815 = vadd.f32 %v1813, %v1814
    %s1816 = vtos %v1815
    %v1817 = vstv %s1816
    %v1818 = vrcp.pop %v1817
    %v1819 = vmul.f32 %v1593, %v1818
    %v1820 = vmul.f32 %v1775, %v447
    %vm1821 = vcmp.eq.s32.totalorder %v596, 0
    %v1822 = vsel %vm1821, %v1047, 0.0
    %v1823 = vadd.f32 %v1822, 0.0
    %vm1824 = vcmp.eq.s32.totalorder %v596, 1
    %v1825 = vsel %vm1824, %v643, 0.0
    %v1826 = vadd.f32 %v1823, %v1825
    %vm1827 = vcmp.eq.s32.totalorder %v596, 2
    %v1828 = vsel %vm1827, %v1045, 0.0
    %v1829 = vadd.f32 %v1826, %v1828
    %vm1830 = vcmp.eq.s32.totalorder %v596, 3
    %v1831 = vsel %vm1830, %v1793, 0.0
    %v1832 = vadd.f32 %v1829, %v1831
    %vm1833 = vcmp.eq.s32.totalorder %v596, 4
    %v1834 = vsel %vm1833, %v1806, 0.0
    %v1835 = vadd.f32 %v1832, %v1834
    %vm1836 = vcmp.eq.s32.totalorder %v596, 5
    %v1837 = vsel %vm1836, %v1819, 0.0
    %v1838 = vadd.f32 %v1835, %v1837
    %vm1839 = vcmp.eq.s32.totalorder %v596, 6
    %v1840 = vsel %vm1839, %v1780, 0.0
    %v1841 = vadd.f32 %v1838, %v1840
    %vm1842 = vcmp.eq.s32.totalorder %v596, 7
    %v1843 = vsel %vm1842, %v1820, 0.0
    %v1844 = vadd.f32 %v1841, %v1843
    %vm1845 = vcmask 57344
    %1846 = vst.msk [vmem:[#allocation8] sm:$0x1] %vm1845, %v1844
    // Predicated region
    $region38: #{tpu_custom_call.1} parent=1 // pred_check
      _
    $region39: #{tpu_custom_call.1} parent=1 // pred_check_branch
      %1848 = sbr.rel (0) target = $region41
    $region40: #{tpu_custom_call.1} parent=1 // pred_region
      %1850 = vsyncadd [#allocation4], 0
      %s1852 = sshll.u32 [#allocation8], 4
      %s1853 = int_to_ptr.vmem [resolvable:$true] %s1852
      %s1854 = sshll.u32 %s6, 4
      %s1855 = int_to_ptr.hbm [resolvable:$true] %s1854
      %1857 = dma.vmem_to_hbm [thread:$0]  %s1853, 16, %s1855, [#allocation4]
    $region41: #{tpu_custom_call.1} parent=1 // pred_fallthru
      _
    // Predicated region
    $region42: #{tpu_custom_call.1} parent=1 // pred_check
      _
    $region43: #{tpu_custom_call.1} parent=1 // pred_check_branch
      %1859 = sbr.rel (0) target = $region45
    $region44: #{tpu_custom_call.1} parent=1 // pred_region
      %1861 = vsyncadd [#allocation10], 0
      %s1862 = sshll.u32 [#allocation9], 4
      %s1863 = int_to_ptr.vmem [resolvable:$true] %s1862
      %s1864 = sshll.u32 %s7, 4
      %s1865 = int_to_ptr.hbm [resolvable:$true] %s1864
      %1870 = dma.vmem_to_hbm [thread:$0]  %s1863, 768, %s1865, [#allocation10], 128, 128, 8
    $region45: #{tpu_custom_call.1} parent=1 // pred_fallthru
      _
    // Predicated region
    $region46: #{tpu_custom_call.1} parent=1 // pred_check
      _
    $region47: #{tpu_custom_call.1} parent=1 // pred_check_branch
      %1872 = sbr.rel (0) target = $region49
    $region48: #{tpu_custom_call.1} parent=1 // pred_region
      %1874 = dma.done [#allocation4], 16
    $region49: #{tpu_custom_call.1} parent=1 // pred_fallthru
      _
    // Predicated region
    $region50: #{tpu_custom_call.1} parent=1 // pred_check
      _
    $region51: #{tpu_custom_call.1} parent=1 // pred_check_branch
      %1876 = sbr.rel (0) target = $region53
    $region52: #{tpu_custom_call.1} parent=1 // pred_region
      %1878 = dma.done [#allocation10], 768
    $region53: #{tpu_custom_call.1} parent=1 // pred_fallthru
      _
    %1879 = vsyncpa [#allocation3], 1
    %1880 = vsyncpa [#allocation6], 1
    %1881 = vsyncpa [#allocation4], 1
    %1882 = vsyncpa [#allocation10], 1

</llo_original>
